<compile_context>
chip_gen: v7x
topology: tpu7x:2x2x1
jax: 0.10.0
libtpu: 0.0.40
codegen_flags: <defaults>
</compile_context>

<pallas_src>
import functools

import jax
import jax.numpy as jnp
from jax import lax
from jax.experimental import pallas as pl
from jax.experimental.pallas import tpu as pltpu


MXU_DTYPE = jnp.bfloat16    # matmul input dtype (accumulation stays f32)
IN_EPS = 1e-5
LRELU_SLOPE = 0.01


# ----------------------------------------------------------------------------
# Pallas kernel: fused double_conv (2 x Conv3x3 + InstanceNorm + LeakyReLU)
# ----------------------------------------------------------------------------
def _double_conv_kernel(x_ref, w1_ref, g1_ref, be1_ref, w2_ref, g2_ref, be2_ref,
                        vm_ref, o_ref, xf2_ref, *, H, W):
    # x_ref  : (1, Cin, NSRC) bf16  zero-padded image, padded spatial grid
    #                               flattened row-major on lanes, + zero tail
    # w*_ref : (3, 3, Cdst, Csrc) bf16  per-tap weights (already transposed)
    # g*/be* : (Cdst, 1) f32        InstanceNorm affine params (column vectors)
    # vm_ref : (1, NQ) f32          1.0 at q = y*Wp + x with y<H, x<W, else 0.0
    # o_ref  : (1, Cout, NQ) f32    output in padded-flat coordinates
    # xf2_ref: (Cmid, NSRC) bf16    VMEM scratch: stage-2 zero-padded input
    Hp, Wp = H + 2, W + 2
    NQ = Hp * Wp
    inv_npix = 1.0 / float(H * W)

    vmask = vm_ref[...]                                     # (1, NQ) f32

    def conv3x3(src, w_ref):
        # src: (Csrc, NSRC) bf16.  Tap (ky, kx) of the conv is the static lane
        # slice of `src` at offset d = ky*Wp + kx; no reshapes needed.
        cdst = w_ref.shape[2]
        acc = jnp.zeros((cdst, NQ), jnp.float32)
        for ky in range(3):
            for kx in range(3):
                d = ky * Wp + kx
                acc = acc + jnp.dot(w_ref[ky, kx], src[:, d:d + NQ],
                                    preferred_element_type=jnp.float32)
        return acc

    def inorm_lrelu(acc, g_ref, be_ref):
        # One-pass masked statistics over the H*W valid lanes, per channel row.
        am = acc * vmask
        s1 = jnp.sum(am, axis=1, keepdims=True)             # (C, 1)
        s2 = jnp.sum(am * acc, axis=1, keepdims=True)       # sum of valid acc^2
        mean = s1 * inv_npix
        var = s2 * inv_npix - mean * mean                   # biased variance
        scale = lax.rsqrt(var + IN_EPS) * g_ref[...]
        y = (acc - mean) * scale + be_ref[...]
        return jnp.where(y >= 0, y, LRELU_SLOPE * y)        # LeakyReLU(0.01)

    # ---- stage 1: conv + IN + LReLU (conv bias cancelled by IN) -------------
    y1 = inorm_lrelu(conv3x3(x_ref[0], w1_ref), g1_ref, be1_ref)

    # ---- build stage-2 zero-padded input directly in VMEM -------------------
    # Valid output q = y*Wp + x maps to padded position p = q + (Wp + 1);
    # all other positions (borders) must be zero.
    xf2_ref[...] = jnp.zeros_like(xf2_ref)
    xf2_ref[:, pl.ds(Wp + 1, NQ)] = (y1 * vmask).astype(xf2_ref.dtype)

    # ---- stage 2: conv + IN + LReLU -----------------------------------------
    y2 = inorm_lrelu(conv3x3(xf2_ref[...], w2_ref), g2_ref, be2_ref)

    # Lane-dense store: (Cout, NQ=324 lanes) instead of Cout=4 on the lane axis.
    o_ref[0] = y2.astype(o_ref.dtype)


def double_conv_pallas(x_nchw, w1, g1, be1, w2, g2, be2):
    """Fused (Conv3x3 -> InstanceNorm2d -> LeakyReLU) x 2.  NCHW in / NCHW out.

    Conv biases are intentionally not inputs: a per-channel constant is exactly
    cancelled by the InstanceNorm mean subtraction that follows each conv.
    """
    N, Cin, H, W = x_nchw.shape
    Cmid = w1.shape[-1]
    Cout = w2.shape[-1]
    Hp, Wp = H + 2, W + 2
    NQ = Hp * Wp                     # flattened padded spatial (lane axis)
    NSRC = NQ + 2 * Wp + 2           # + zero tail so every tap slice is in range

    # Layout plumbing, fused by XLA into the producer of x: zero-pad spatially,
    # flatten the padded grid onto the last axis, add the zero tail, cast bf16.
    xp = jnp.pad(x_nchw, ((0, 0), (0, 0), (1, 1), (1, 1)))
    xf = jnp.pad(xp.reshape(N, Cin, NQ), ((0, 0), (0, 0), (0, NSRC - NQ)))
    xf = xf.astype(MXU_DTYPE)

    # Pre-packed weights (done once, outside the kernel): (3, 3, Cdst, Csrc).
    w1t = jnp.transpose(w1, (0, 1, 3, 2)).astype(MXU_DTYPE)
    w2t = jnp.transpose(w2, (0, 1, 3, 2)).astype(MXU_DTYPE)
    g1c = g1.reshape(Cmid, 1).astype(jnp.float32)
    be1c = be1.reshape(Cmid, 1).astype(jnp.float32)
    g2c = g2.reshape(Cout, 1).astype(jnp.float32)
    be2c = be2.reshape(Cout, 1).astype(jnp.float32)

    # Validity mask of the flattened padded grid: 1 at q = y*Wp + x, y<H, x<W.
    row = jnp.arange(Hp, dtype=jnp.int32)[:, None]
    col = jnp.arange(Wp, dtype=jnp.int32)[None, :]
    vmask = ((row < H) & (col < W)).astype(jnp.float32).reshape(1, NQ)

    kernel = functools.partial(_double_conv_kernel, H=H, W=W)

    out_flat = pl.pallas_call(
        kernel,
        out_shape=jax.ShapeDtypeStruct((N, Cout, NQ), jnp.float32),
        grid_spec=pltpu.PrefetchScalarGridSpec(
            num_scalar_prefetch=0,
            grid=(N,),
            in_specs=[
                pl.BlockSpec((1, Cin, NSRC), lambda n: (n, 0, 0)),
                pl.BlockSpec((3, 3, Cmid, Cin), lambda n: (0, 0, 0, 0)),
                pl.BlockSpec((Cmid, 1), lambda n: (0, 0)),
                pl.BlockSpec((Cmid, 1), lambda n: (0, 0)),
                pl.BlockSpec((3, 3, Cout, Cmid), lambda n: (0, 0, 0, 0)),
                pl.BlockSpec((Cout, 1), lambda n: (0, 0)),
                pl.BlockSpec((Cout, 1), lambda n: (0, 0)),
                pl.BlockSpec((1, NQ), lambda n: (0, 0)),
            ],
            out_specs=pl.BlockSpec((1, Cout, NQ), lambda n: (n, 0, 0)),
            scratch_shapes=[pltpu.VMEM((Cmid, NSRC), MXU_DTYPE)],
        ),
        compiler_params=pltpu.CompilerParams(
            dimension_semantics=("parallel",)),   # v7x: shard batch over 2 TCs
    )(xf, w1t, g1c, be1c, w2t, g2c, be2c, vmask)

    # Drop padding positions: q = y*Wp + x  ->  (y, x) with y < H, x < W.
    return out_flat.reshape(N, Cout, Hp, Wp)[:, :, :H, :W]


# ----------------------------------------------------------------------------
# Plain-JAX glue: bilinear upsample (align_corners=True), pad, concat
# ----------------------------------------------------------------------------
def upsample_bilinear_2x_align_corners(x_nchw):
    """Matches nn.Upsample(scale_factor=2, mode='bilinear', align_corners=True)."""
    N, C, H, W = x_nchw.shape
    Ho, Wo = 2 * H, 2 * W

    def coords(n_in, n_out):
        if n_in == 1:
            z = jnp.zeros((n_out,), jnp.float32)
            zi = jnp.zeros((n_out,), jnp.int32)
            return z, zi, zi
        s = jnp.arange(n_out, dtype=jnp.float32) * (n_in - 1) / (n_out - 1)
        i0 = jnp.clip(jnp.floor(s).astype(jnp.int32), 0, n_in - 2)
        i1 = i0 + 1
        return s - i0.astype(jnp.float32), i0, i1

    fy, y0, y1 = coords(H, Ho)
    fx, x0, x1 = coords(W, Wo)

    top = x_nchw[:, :, y0, :]
    bot = x_nchw[:, :, y1, :]
    v = top * (1.0 - fy)[None, None, :, None] + bot * fy[None, None, :, None]
    left = v[:, :, :, x0]
    right = v[:, :, :, x1]
    return left * (1.0 - fx) + right * fx


def up_forward(xl_nchw, xr_nchw, params):
    """Forward of `up`: NCHW in / NCHW out (PyTorch convention, no transposes)."""
    xr_up = upsample_bilinear_2x_align_corners(xr_nchw)

    diffH = xr_up.shape[2] - xl_nchw.shape[2]
    diffW = xr_up.shape[3] - xl_nchw.shape[3]
    xl_p = jnp.pad(
        xl_nchw,
        ((0, 0), (0, 0),
         (diffH // 2, diffH - diffH // 2),
         (diffW // 2, diffW - diffW // 2)))

    x = jnp.concatenate([xr_up, xl_p], axis=1)      # NCHW, C = in_ch
    # b1/b2 are not used: conv bias is a no-op under the following InstanceNorm.
    return double_conv_pallas(x, params["w1"], params["g1"], params["be1"],
                              params["w2"], params["g2"], params["be2"])


# ----------------------------------------------------------------------------
# Pure-JAX reference (bias kept, to also verify the bias-cancellation claim)
# ----------------------------------------------------------------------------
def _ref_conv_in_lrelu(x, w, b, gamma, beta):
    # Same MXU precision as the kernel: bf16 conv inputs, f32 accumulation.
    y = lax.conv_general_dilated(
        x.astype(MXU_DTYPE), w.astype(MXU_DTYPE),
        window_strides=(1, 1), padding="SAME",
        dimension_numbers=("NCHW", "HWIO", "NCHW"),
        preferred_element_type=jnp.float32)
    y = y + b[None, :, None, None]
    mean = jnp.mean(y, axis=(2, 3), keepdims=True)
    var = jnp.mean((y - mean) ** 2, axis=(2, 3), keepdims=True)
    y = (y - mean) * lax.rsqrt(var + IN_EPS)
    y = y * gamma[None, :, None, None] + beta[None, :, None, None]
    return jnp.where(y >= 0, y, LRELU_SLOPE * y)


def up_forward_ref(xl_nchw, xr_nchw, params):
    xr_up = upsample_bilinear_2x_align_corners(xr_nchw)
    diffH = xr_up.shape[2] - xl_nchw.shape[2]
    diffW = xr_up.shape[3] - xl_nchw.shape[3]
    xl_p = jnp.pad(
        xl_nchw,
        ((0, 0), (0, 0),
         (diffH // 2, diffH - diffH // 2),
         (diffW // 2, diffW - diffW // 2)))
    x = jnp.concatenate([xr_up, xl_p], axis=1)
    x = _ref_conv_in_lrelu(x, params["w1"], params["b1"],
                           params["g1"], params["be1"])
    x = _ref_conv_in_lrelu(x, params["w2"], params["b2"],
                           params["g2"], params["be2"])
    return x


# ----------------------------------------------------------------------------
# Main
# ----------------------------------------------------------------------------
if __name__ == "__main__":
    key = jax.random.PRNGKey(0)
    keys = jax.random.split(key, 10)

    # Shapes: xl (skip connection) at full res, xr at half res (UNet `up`).
    N = 2
    C_xl, C_xr = 4, 4          # in_ch = C_xr + C_xl = 8
    out_ch = 4
    H, W = 16, 16
    in_ch = C_xl + C_xr

    xl = jax.random.normal(keys[0], (N, C_xl, H, W), jnp.float32)
    xr = jax.random.normal(keys[1], (N, C_xr, H // 2, W // 2), jnp.float32)

    params = {
        "w1": 0.1 * jax.random.normal(keys[2], (3, 3, in_ch, out_ch), jnp.float32),
        "b1": 0.1 * jax.random.normal(keys[3], (out_ch,), jnp.float32),
        "g1": 1.0 + 0.1 * jax.random.normal(keys[4], (out_ch,), jnp.float32),
        "be1": 0.1 * jax.random.normal(keys[5], (out_ch,), jnp.float32),
        "w2": 0.1 * jax.random.normal(keys[6], (3, 3, out_ch, out_ch), jnp.float32),
        "b2": 0.1 * jax.random.normal(keys[7], (out_ch,), jnp.float32),
        "g2": 1.0 + 0.1 * jax.random.normal(keys[8], (out_ch,), jnp.float32),
        "be2": 0.1 * jax.random.normal(keys[9], (out_ch,), jnp.float32),
    }

    out = jax.block_until_ready(jax.jit(up_forward)(xl, xr, params))
    ref = jax.block_until_ready(jax.jit(up_forward_ref)(xl, xr, params))

    assert out.shape == (N, out_ch, H, W), out.shape
    max_err = float(jnp.max(jnp.abs(out - ref)))
    # bf16 MXU inputs (both paths) + different accumulation/variance orderings.
    assert jnp.allclose(out, ref, atol=5e-3, rtol=5e-3), max_err

    print("KERNEL_OK")
</pallas_src>

<mosaic_0001>
module attributes {stable_mosaic.version = 11 : i64} {
  func.func @_double_conv_kernel(%arg0: i32, %arg1: memref<1x8x362xbf16, #tpu.memory_space<vmem>>, %arg2: memref<3x3x4x8xbf16, #tpu.memory_space<vmem>>, %arg3: memref<4x1xf32, #tpu.memory_space<vmem>>, %arg4: memref<4x1xf32, #tpu.memory_space<vmem>>, %arg5: memref<3x3x4x4xbf16, #tpu.memory_space<vmem>>, %arg6: memref<4x1xf32, #tpu.memory_space<vmem>>, %arg7: memref<4x1xf32, #tpu.memory_space<vmem>>, %arg8: memref<1x324xf32, #tpu.memory_space<vmem>>, %arg9: memref<1x4x324xf32, #tpu.memory_space<vmem>>, %arg10: memref<4x362xbf16, #tpu.memory_space<vmem>>) attributes {dimension_semantics = [#tpu.dimension_semantics<parallel>], iteration_bounds = array<i64: 2>, scalar_prefetch = 0 : i64, scratch_operands = 1 : i64, tpu.core_type = #tpu.core_type<tc>, window_params = [{transform_indices = @transform_0, window_bounds = array<i64: 1, 8, 362>}, {pipeline_mode = #tpu.pipeline_mode<synchronous>, transform_indices = @transform_1, window_bounds = array<i64: 3, 3, 4, 8>}, {pipeline_mode = #tpu.pipeline_mode<synchronous>, transform_indices = @transform_2, window_bounds = array<i64: 4, 1>}, {pipeline_mode = #tpu.pipeline_mode<synchronous>, transform_indices = @transform_3, window_bounds = array<i64: 4, 1>}, {pipeline_mode = #tpu.pipeline_mode<synchronous>, transform_indices = @transform_4, window_bounds = array<i64: 3, 3, 4, 4>}, {pipeline_mode = #tpu.pipeline_mode<synchronous>, transform_indices = @transform_5, window_bounds = array<i64: 4, 1>}, {pipeline_mode = #tpu.pipeline_mode<synchronous>, transform_indices = @transform_6, window_bounds = array<i64: 4, 1>}, {pipeline_mode = #tpu.pipeline_mode<synchronous>, transform_indices = @transform_7, window_bounds = array<i64: 1, 324>}, {transform_indices = @transform_8, window_bounds = array<i64: 1, 4, 324>}]} {
    %c0 = arith.constant 0 : index
    %c0_0 = arith.constant 0 : index
    %0 = vector.load %arg8[%c0, %c0_0] : memref<1x324xf32, #tpu.memory_space<vmem>>, vector<1x324xf32>
    %c0_1 = arith.constant 0 : index
    %c0_2 = arith.constant 0 : index
    %c0_3 = arith.constant 0 : index
    %1 = vector.load %arg1[%c0_1, %c0_2, %c0_3] : memref<1x8x362xbf16, #tpu.memory_space<vmem>>, vector<1x8x362xbf16>
    %2 = vector.shape_cast %1 : vector<1x8x362xbf16> to vector<8x362xbf16>
    %cst = arith.constant 0.000000e+00 : f32
    %3 = vector.broadcast %cst : f32 to vector<4x324xf32>
    %c0_4 = arith.constant 0 : index
    %c0_5 = arith.constant 0 : index
    %c0_6 = arith.constant 0 : index
    %c0_7 = arith.constant 0 : index
    %4 = vector.load %arg2[%c0_4, %c0_5, %c0_6, %c0_7] : memref<3x3x4x8xbf16, #tpu.memory_space<vmem>>, vector<1x1x4x8xbf16>
    %5 = vector.shape_cast %4 : vector<1x1x4x8xbf16> to vector<4x8xbf16>
    %6 = vector.extract_strided_slice %2 {offsets = [0, 0], sizes = [8, 324], strides = [1, 1]} : vector<8x362xbf16> to vector<8x324xbf16>
    %cst_8 = arith.constant dense<0.000000e+00> : vector<4x324xf32>
    %7 = tpu.matmul %5, %6, %cst_8 {dimension_numbers = #tpu.dot_dimension_numbers<[1], [0], [0], [1], [0, 0, 1, 1], [], []>} : vector<4x8xbf16>, vector<8x324xbf16>, vector<4x324xf32> -> vector<4x324xf32>
    %8 = arith.addf %3, %7 : vector<4x324xf32>
    %c0_9 = arith.constant 0 : index
    %c1 = arith.constant 1 : index
    %c0_10 = arith.constant 0 : index
    %c0_11 = arith.constant 0 : index
    %9 = vector.load %arg2[%c0_9, %c1, %c0_10, %c0_11] : memref<3x3x4x8xbf16, #tpu.memory_space<vmem>>, vector<1x1x4x8xbf16>
    %10 = vector.shape_cast %9 : vector<1x1x4x8xbf16> to vector<4x8xbf16>
    %11 = vector.extract_strided_slice %2 {offsets = [0, 1], sizes = [8, 324], strides = [1, 1]} : vector<8x362xbf16> to vector<8x324xbf16>
    %cst_12 = arith.constant dense<0.000000e+00> : vector<4x324xf32>
    %12 = tpu.matmul %10, %11, %cst_12 {dimension_numbers = #tpu.dot_dimension_numbers<[1], [0], [0], [1], [0, 0, 1, 1], [], []>} : vector<4x8xbf16>, vector<8x324xbf16>, vector<4x324xf32> -> vector<4x324xf32>
    %13 = arith.addf %8, %12 : vector<4x324xf32>
    %c0_13 = arith.constant 0 : index
    %c2 = arith.constant 2 : index
    %c0_14 = arith.constant 0 : index
    %c0_15 = arith.constant 0 : index
    %14 = vector.load %arg2[%c0_13, %c2, %c0_14, %c0_15] : memref<3x3x4x8xbf16, #tpu.memory_space<vmem>>, vector<1x1x4x8xbf16>
    %15 = vector.shape_cast %14 : vector<1x1x4x8xbf16> to vector<4x8xbf16>
    %16 = vector.extract_strided_slice %2 {offsets = [0, 2], sizes = [8, 324], strides = [1, 1]} : vector<8x362xbf16> to vector<8x324xbf16>
    %cst_16 = arith.constant dense<0.000000e+00> : vector<4x324xf32>
    %17 = tpu.matmul %15, %16, %cst_16 {dimension_numbers = #tpu.dot_dimension_numbers<[1], [0], [0], [1], [0, 0, 1, 1], [], []>} : vector<4x8xbf16>, vector<8x324xbf16>, vector<4x324xf32> -> vector<4x324xf32>
    %18 = arith.addf %13, %17 : vector<4x324xf32>
    %c1_17 = arith.constant 1 : index
    %c0_18 = arith.constant 0 : index
    %c0_19 = arith.constant 0 : index
    %c0_20 = arith.constant 0 : index
    %19 = vector.load %arg2[%c1_17, %c0_18, %c0_19, %c0_20] : memref<3x3x4x8xbf16, #tpu.memory_space<vmem>>, vector<1x1x4x8xbf16>
    %20 = vector.shape_cast %19 : vector<1x1x4x8xbf16> to vector<4x8xbf16>
    %21 = vector.extract_strided_slice %2 {offsets = [0, 18], sizes = [8, 324], strides = [1, 1]} : vector<8x362xbf16> to vector<8x324xbf16>
    %cst_21 = arith.constant dense<0.000000e+00> : vector<4x324xf32>
    %22 = tpu.matmul %20, %21, %cst_21 {dimension_numbers = #tpu.dot_dimension_numbers<[1], [0], [0], [1], [0, 0, 1, 1], [], []>} : vector<4x8xbf16>, vector<8x324xbf16>, vector<4x324xf32> -> vector<4x324xf32>
    %23 = arith.addf %18, %22 : vector<4x324xf32>
    %c1_22 = arith.constant 1 : index
    %c1_23 = arith.constant 1 : index
    %c0_24 = arith.constant 0 : index
    %c0_25 = arith.constant 0 : index
    %24 = vector.load %arg2[%c1_22, %c1_23, %c0_24, %c0_25] : memref<3x3x4x8xbf16, #tpu.memory_space<vmem>>, vector<1x1x4x8xbf16>
    %25 = vector.shape_cast %24 : vector<1x1x4x8xbf16> to vector<4x8xbf16>
    %26 = vector.extract_strided_slice %2 {offsets = [0, 19], sizes = [8, 324], strides = [1, 1]} : vector<8x362xbf16> to vector<8x324xbf16>
    %cst_26 = arith.constant dense<0.000000e+00> : vector<4x324xf32>
    %27 = tpu.matmul %25, %26, %cst_26 {dimension_numbers = #tpu.dot_dimension_numbers<[1], [0], [0], [1], [0, 0, 1, 1], [], []>} : vector<4x8xbf16>, vector<8x324xbf16>, vector<4x324xf32> -> vector<4x324xf32>
    %28 = arith.addf %23, %27 : vector<4x324xf32>
    %c1_27 = arith.constant 1 : index
    %c2_28 = arith.constant 2 : index
    %c0_29 = arith.constant 0 : index
    %c0_30 = arith.constant 0 : index
    %29 = vector.load %arg2[%c1_27, %c2_28, %c0_29, %c0_30] : memref<3x3x4x8xbf16, #tpu.memory_space<vmem>>, vector<1x1x4x8xbf16>
    %30 = vector.shape_cast %29 : vector<1x1x4x8xbf16> to vector<4x8xbf16>
    %31 = vector.extract_strided_slice %2 {offsets = [0, 20], sizes = [8, 324], strides = [1, 1]} : vector<8x362xbf16> to vector<8x324xbf16>
    %cst_31 = arith.constant dense<0.000000e+00> : vector<4x324xf32>
    %32 = tpu.matmul %30, %31, %cst_31 {dimension_numbers = #tpu.dot_dimension_numbers<[1], [0], [0], [1], [0, 0, 1, 1], [], []>} : vector<4x8xbf16>, vector<8x324xbf16>, vector<4x324xf32> -> vector<4x324xf32>
    %33 = arith.addf %28, %32 : vector<4x324xf32>
    %c2_32 = arith.constant 2 : index
    %c0_33 = arith.constant 0 : index
    %c0_34 = arith.constant 0 : index
    %c0_35 = arith.constant 0 : index
    %34 = vector.load %arg2[%c2_32, %c0_33, %c0_34, %c0_35] : memref<3x3x4x8xbf16, #tpu.memory_space<vmem>>, vector<1x1x4x8xbf16>
    %35 = vector.shape_cast %34 : vector<1x1x4x8xbf16> to vector<4x8xbf16>
    %36 = vector.extract_strided_slice %2 {offsets = [0, 36], sizes = [8, 324], strides = [1, 1]} : vector<8x362xbf16> to vector<8x324xbf16>
    %cst_36 = arith.constant dense<0.000000e+00> : vector<4x324xf32>
    %37 = tpu.matmul %35, %36, %cst_36 {dimension_numbers = #tpu.dot_dimension_numbers<[1], [0], [0], [1], [0, 0, 1, 1], [], []>} : vector<4x8xbf16>, vector<8x324xbf16>, vector<4x324xf32> -> vector<4x324xf32>
    %38 = arith.addf %33, %37 : vector<4x324xf32>
    %c2_37 = arith.constant 2 : index
    %c1_38 = arith.constant 1 : index
    %c0_39 = arith.constant 0 : index
    %c0_40 = arith.constant 0 : index
    %39 = vector.load %arg2[%c2_37, %c1_38, %c0_39, %c0_40] : memref<3x3x4x8xbf16, #tpu.memory_space<vmem>>, vector<1x1x4x8xbf16>
    %40 = vector.shape_cast %39 : vector<1x1x4x8xbf16> to vector<4x8xbf16>
    %41 = vector.extract_strided_slice %2 {offsets = [0, 37], sizes = [8, 324], strides = [1, 1]} : vector<8x362xbf16> to vector<8x324xbf16>
    %cst_41 = arith.constant dense<0.000000e+00> : vector<4x324xf32>
    %42 = tpu.matmul %40, %41, %cst_41 {dimension_numbers = #tpu.dot_dimension_numbers<[1], [0], [0], [1], [0, 0, 1, 1], [], []>} : vector<4x8xbf16>, vector<8x324xbf16>, vector<4x324xf32> -> vector<4x324xf32>
    %43 = arith.addf %38, %42 : vector<4x324xf32>
    %c2_42 = arith.constant 2 : index
    %c2_43 = arith.constant 2 : index
    %c0_44 = arith.constant 0 : index
    %c0_45 = arith.constant 0 : index
    %44 = vector.load %arg2[%c2_42, %c2_43, %c0_44, %c0_45] : memref<3x3x4x8xbf16, #tpu.memory_space<vmem>>, vector<1x1x4x8xbf16>
    %45 = vector.shape_cast %44 : vector<1x1x4x8xbf16> to vector<4x8xbf16>
    %46 = vector.extract_strided_slice %2 {offsets = [0, 38], sizes = [8, 324], strides = [1, 1]} : vector<8x362xbf16> to vector<8x324xbf16>
    %cst_46 = arith.constant dense<0.000000e+00> : vector<4x324xf32>
    %47 = tpu.matmul %45, %46, %cst_46 {dimension_numbers = #tpu.dot_dimension_numbers<[1], [0], [0], [1], [0, 0, 1, 1], [], []>} : vector<4x8xbf16>, vector<8x324xbf16>, vector<4x324xf32> -> vector<4x324xf32>
    %48 = arith.addf %43, %47 : vector<4x324xf32>
    %49 = vector.broadcast %0 : vector<1x324xf32> to vector<4x324xf32>
    %50 = arith.mulf %48, %49 : vector<4x324xf32>
    %cst_47 = arith.constant dense<0.000000e+00> : vector<4xf32>
    %51 = vector.multi_reduction <add>, %50, %cst_47 [1] : vector<4x324xf32> to vector<4xf32>
    %52 = vector.shape_cast %51 : vector<4xf32> to vector<4x1xf32>
    %53 = arith.mulf %50, %48 : vector<4x324xf32>
    %cst_48 = arith.constant dense<0.000000e+00> : vector<4xf32>
    %54 = vector.multi_reduction <add>, %53, %cst_48 [1] : vector<4x324xf32> to vector<4xf32>
    %55 = vector.shape_cast %54 : vector<4xf32> to vector<4x1xf32>
    %cst_49 = arith.constant 3.906250e-03 : f32
    %56 = vector.broadcast %cst_49 : f32 to vector<4x1xf32>
    %57 = arith.mulf %52, %56 : vector<4x1xf32>
    %cst_50 = arith.constant 3.906250e-03 : f32
    %58 = vector.broadcast %cst_50 : f32 to vector<4x1xf32>
    %59 = arith.mulf %55, %58 : vector<4x1xf32>
    %60 = arith.mulf %57, %57 : vector<4x1xf32>
    %61 = arith.subf %59, %60 : vector<4x1xf32>
    %cst_51 = arith.constant 9.99999974E-6 : f32
    %62 = vector.broadcast %cst_51 : f32 to vector<4x1xf32>
    %63 = arith.addf %61, %62 : vector<4x1xf32>
    %64 = math.rsqrt %63 : vector<4x1xf32>
    %c0_52 = arith.constant 0 : index
    %c0_53 = arith.constant 0 : index
    %65 = vector.load %arg3[%c0_52, %c0_53] : memref<4x1xf32, #tpu.memory_space<vmem>>, vector<4x1xf32>
    %66 = arith.mulf %64, %65 : vector<4x1xf32>
    %67 = vector.broadcast %57 : vector<4x1xf32> to vector<4x324xf32>
    %68 = arith.subf %48, %67 : vector<4x324xf32>
    %69 = vector.broadcast %66 : vector<4x1xf32> to vector<4x324xf32>
    %70 = arith.mulf %68, %69 : vector<4x324xf32>
    %c0_54 = arith.constant 0 : index
    %c0_55 = arith.constant 0 : index
    %71 = vector.load %arg4[%c0_54, %c0_55] : memref<4x1xf32, #tpu.memory_space<vmem>>, vector<4x1xf32>
    %72 = vector.broadcast %71 : vector<4x1xf32> to vector<4x324xf32>
    %73 = arith.addf %70, %72 : vector<4x324xf32>
    %cst_56 = arith.constant 0.000000e+00 : f32
    %74 = vector.broadcast %cst_56 : f32 to vector<4x324xf32>
    %75 = arith.cmpf oge, %73, %74 : vector<4x324xf32>
    %cst_57 = arith.constant 0.00999999977 : f32
    %76 = vector.broadcast %cst_57 : f32 to vector<4x324xf32>
    %77 = arith.mulf %76, %73 : vector<4x324xf32>
    %78 = arith.select %75, %73, %77 : vector<4x324xi1>, vector<4x324xf32>
    %cst_58 = arith.constant 0.000000e+00 : bf16
    %79 = vector.broadcast %cst_58 : bf16 to vector<4x362xbf16>
    %c0_59 = arith.constant 0 : index
    %c0_60 = arith.constant 0 : index
    %80 = vector.load %arg10[%c0_59, %c0_60] : memref<4x362xbf16, #tpu.memory_space<vmem>>, vector<4x362xbf16>
    tpu.vector_store %arg10[%c0_59, %c0_60], %79 {strides = array<i32>} : memref<4x362xbf16, #tpu.memory_space<vmem>>, vector<4x362xbf16>,
    %81 = vector.broadcast %0 : vector<1x324xf32> to vector<4x324xf32>
    %82 = arith.mulf %78, %81 : vector<4x324xf32>
    %83 = arith.truncf %82 : vector<4x324xf32> to vector<4x324xbf16>
    %c0_61 = arith.constant 0 : index
    %c19 = arith.constant 19 : index
    %84 = vector.load %arg10[%c0_61, %c19] : memref<4x362xbf16, #tpu.memory_space<vmem>>, vector<4x324xbf16>
    tpu.vector_store %arg10[%c0_61, %c19], %83 {strides = array<i32>} : memref<4x362xbf16, #tpu.memory_space<vmem>>, vector<4x324xbf16>,
    %c0_62 = arith.constant 0 : index
    %c0_63 = arith.constant 0 : index
    %85 = vector.load %arg10[%c0_62, %c0_63] : memref<4x362xbf16, #tpu.memory_space<vmem>>, vector<4x362xbf16>
    %cst_64 = arith.constant 0.000000e+00 : f32
    %86 = vector.broadcast %cst_64 : f32 to vector<4x324xf32>
    %c0_65 = arith.constant 0 : index
    %c0_66 = arith.constant 0 : index
    %c0_67 = arith.constant 0 : index
    %c0_68 = arith.constant 0 : index
    %87 = vector.load %arg5[%c0_65, %c0_66, %c0_67, %c0_68] : memref<3x3x4x4xbf16, #tpu.memory_space<vmem>>, vector<1x1x4x4xbf16>
    %88 = vector.shape_cast %87 : vector<1x1x4x4xbf16> to vector<4x4xbf16>
    %89 = vector.extract_strided_slice %85 {offsets = [0, 0], sizes = [4, 324], strides = [1, 1]} : vector<4x362xbf16> to vector<4x324xbf16>
    %cst_69 = arith.constant dense<0.000000e+00> : vector<4x324xf32>
    %90 = tpu.matmul %88, %89, %cst_69 {dimension_numbers = #tpu.dot_dimension_numbers<[1], [0], [0], [1], [0, 0, 1, 1], [], []>} : vector<4x4xbf16>, vector<4x324xbf16>, vector<4x324xf32> -> vector<4x324xf32>
    %91 = arith.addf %86, %90 : vector<4x324xf32>
    %c0_70 = arith.constant 0 : index
    %c1_71 = arith.constant 1 : index
    %c0_72 = arith.constant 0 : index
    %c0_73 = arith.constant 0 : index
    %92 = vector.load %arg5[%c0_70, %c1_71, %c0_72, %c0_73] : memref<3x3x4x4xbf16, #tpu.memory_space<vmem>>, vector<1x1x4x4xbf16>
    %93 = vector.shape_cast %92 : vector<1x1x4x4xbf16> to vector<4x4xbf16>
    %94 = vector.extract_strided_slice %85 {offsets = [0, 1], sizes = [4, 324], strides = [1, 1]} : vector<4x362xbf16> to vector<4x324xbf16>
    %cst_74 = arith.constant dense<0.000000e+00> : vector<4x324xf32>
    %95 = tpu.matmul %93, %94, %cst_74 {dimension_numbers = #tpu.dot_dimension_numbers<[1], [0], [0], [1], [0, 0, 1, 1], [], []>} : vector<4x4xbf16>, vector<4x324xbf16>, vector<4x324xf32> -> vector<4x324xf32>
    %96 = arith.addf %91, %95 : vector<4x324xf32>
    %c0_75 = arith.constant 0 : index
    %c2_76 = arith.constant 2 : index
    %c0_77 = arith.constant 0 : index
    %c0_78 = arith.constant 0 : index
    %97 = vector.load %arg5[%c0_75, %c2_76, %c0_77, %c0_78] : memref<3x3x4x4xbf16, #tpu.memory_space<vmem>>, vector<1x1x4x4xbf16>
    %98 = vector.shape_cast %97 : vector<1x1x4x4xbf16> to vector<4x4xbf16>
    %99 = vector.extract_strided_slice %85 {offsets = [0, 2], sizes = [4, 324], strides = [1, 1]} : vector<4x362xbf16> to vector<4x324xbf16>
    %cst_79 = arith.constant dense<0.000000e+00> : vector<4x324xf32>
    %100 = tpu.matmul %98, %99, %cst_79 {dimension_numbers = #tpu.dot_dimension_numbers<[1], [0], [0], [1], [0, 0, 1, 1], [], []>} : vector<4x4xbf16>, vector<4x324xbf16>, vector<4x324xf32> -> vector<4x324xf32>
    %101 = arith.addf %96, %100 : vector<4x324xf32>
    %c1_80 = arith.constant 1 : index
    %c0_81 = arith.constant 0 : index
    %c0_82 = arith.constant 0 : index
    %c0_83 = arith.constant 0 : index
    %102 = vector.load %arg5[%c1_80, %c0_81, %c0_82, %c0_83] : memref<3x3x4x4xbf16, #tpu.memory_space<vmem>>, vector<1x1x4x4xbf16>
    %103 = vector.shape_cast %102 : vector<1x1x4x4xbf16> to vector<4x4xbf16>
    %104 = vector.extract_strided_slice %85 {offsets = [0, 18], sizes = [4, 324], strides = [1, 1]} : vector<4x362xbf16> to vector<4x324xbf16>
    %cst_84 = arith.constant dense<0.000000e+00> : vector<4x324xf32>
    %105 = tpu.matmul %103, %104, %cst_84 {dimension_numbers = #tpu.dot_dimension_numbers<[1], [0], [0], [1], [0, 0, 1, 1], [], []>} : vector<4x4xbf16>, vector<4x324xbf16>, vector<4x324xf32> -> vector<4x324xf32>
    %106 = arith.addf %101, %105 : vector<4x324xf32>
    %c1_85 = arith.constant 1 : index
    %c1_86 = arith.constant 1 : index
    %c0_87 = arith.constant 0 : index
    %c0_88 = arith.constant 0 : index
    %107 = vector.load %arg5[%c1_85, %c1_86, %c0_87, %c0_88] : memref<3x3x4x4xbf16, #tpu.memory_space<vmem>>, vector<1x1x4x4xbf16>
    %108 = vector.shape_cast %107 : vector<1x1x4x4xbf16> to vector<4x4xbf16>
    %109 = vector.extract_strided_slice %85 {offsets = [0, 19], sizes = [4, 324], strides = [1, 1]} : vector<4x362xbf16> to vector<4x324xbf16>
    %cst_89 = arith.constant dense<0.000000e+00> : vector<4x324xf32>
    %110 = tpu.matmul %108, %109, %cst_89 {dimension_numbers = #tpu.dot_dimension_numbers<[1], [0], [0], [1], [0, 0, 1, 1], [], []>} : vector<4x4xbf16>, vector<4x324xbf16>, vector<4x324xf32> -> vector<4x324xf32>
    %111 = arith.addf %106, %110 : vector<4x324xf32>
    %c1_90 = arith.constant 1 : index
    %c2_91 = arith.constant 2 : index
    %c0_92 = arith.constant 0 : index
    %c0_93 = arith.constant 0 : index
    %112 = vector.load %arg5[%c1_90, %c2_91, %c0_92, %c0_93] : memref<3x3x4x4xbf16, #tpu.memory_space<vmem>>, vector<1x1x4x4xbf16>
    %113 = vector.shape_cast %112 : vector<1x1x4x4xbf16> to vector<4x4xbf16>
    %114 = vector.extract_strided_slice %85 {offsets = [0, 20], sizes = [4, 324], strides = [1, 1]} : vector<4x362xbf16> to vector<4x324xbf16>
    %cst_94 = arith.constant dense<0.000000e+00> : vector<4x324xf32>
    %115 = tpu.matmul %113, %114, %cst_94 {dimension_numbers = #tpu.dot_dimension_numbers<[1], [0], [0], [1], [0, 0, 1, 1], [], []>} : vector<4x4xbf16>, vector<4x324xbf16>, vector<4x324xf32> -> vector<4x324xf32>
    %116 = arith.addf %111, %115 : vector<4x324xf32>
    %c2_95 = arith.constant 2 : index
    %c0_96 = arith.constant 0 : index
    %c0_97 = arith.constant 0 : index
    %c0_98 = arith.constant 0 : index
    %117 = vector.load %arg5[%c2_95, %c0_96, %c0_97, %c0_98] : memref<3x3x4x4xbf16, #tpu.memory_space<vmem>>, vector<1x1x4x4xbf16>
    %118 = vector.shape_cast %117 : vector<1x1x4x4xbf16> to vector<4x4xbf16>
    %119 = vector.extract_strided_slice %85 {offsets = [0, 36], sizes = [4, 324], strides = [1, 1]} : vector<4x362xbf16> to vector<4x324xbf16>
    %cst_99 = arith.constant dense<0.000000e+00> : vector<4x324xf32>
    %120 = tpu.matmul %118, %119, %cst_99 {dimension_numbers = #tpu.dot_dimension_numbers<[1], [0], [0], [1], [0, 0, 1, 1], [], []>} : vector<4x4xbf16>, vector<4x324xbf16>, vector<4x324xf32> -> vector<4x324xf32>
    %121 = arith.addf %116, %120 : vector<4x324xf32>
    %c2_100 = arith.constant 2 : index
    %c1_101 = arith.constant 1 : index
    %c0_102 = arith.constant 0 : index
    %c0_103 = arith.constant 0 : index
    %122 = vector.load %arg5[%c2_100, %c1_101, %c0_102, %c0_103] : memref<3x3x4x4xbf16, #tpu.memory_space<vmem>>, vector<1x1x4x4xbf16>
    %123 = vector.shape_cast %122 : vector<1x1x4x4xbf16> to vector<4x4xbf16>
    %124 = vector.extract_strided_slice %85 {offsets = [0, 37], sizes = [4, 324], strides = [1, 1]} : vector<4x362xbf16> to vector<4x324xbf16>
    %cst_104 = arith.constant dense<0.000000e+00> : vector<4x324xf32>
    %125 = tpu.matmul %123, %124, %cst_104 {dimension_numbers = #tpu.dot_dimension_numbers<[1], [0], [0], [1], [0, 0, 1, 1], [], []>} : vector<4x4xbf16>, vector<4x324xbf16>, vector<4x324xf32> -> vector<4x324xf32>
    %126 = arith.addf %121, %125 : vector<4x324xf32>
    %c2_105 = arith.constant 2 : index
    %c2_106 = arith.constant 2 : index
    %c0_107 = arith.constant 0 : index
    %c0_108 = arith.constant 0 : index
    %127 = vector.load %arg5[%c2_105, %c2_106, %c0_107, %c0_108] : memref<3x3x4x4xbf16, #tpu.memory_space<vmem>>, vector<1x1x4x4xbf16>
    %128 = vector.shape_cast %127 : vector<1x1x4x4xbf16> to vector<4x4xbf16>
    %129 = vector.extract_strided_slice %85 {offsets = [0, 38], sizes = [4, 324], strides = [1, 1]} : vector<4x362xbf16> to vector<4x324xbf16>
    %cst_109 = arith.constant dense<0.000000e+00> : vector<4x324xf32>
    %130 = tpu.matmul %128, %129, %cst_109 {dimension_numbers = #tpu.dot_dimension_numbers<[1], [0], [0], [1], [0, 0, 1, 1], [], []>} : vector<4x4xbf16>, vector<4x324xbf16>, vector<4x324xf32> -> vector<4x324xf32>
    %131 = arith.addf %126, %130 : vector<4x324xf32>
    %132 = vector.broadcast %0 : vector<1x324xf32> to vector<4x324xf32>
    %133 = arith.mulf %131, %132 : vector<4x324xf32>
    %cst_110 = arith.constant dense<0.000000e+00> : vector<4xf32>
    %134 = vector.multi_reduction <add>, %133, %cst_110 [1] : vector<4x324xf32> to vector<4xf32>
    %135 = vector.shape_cast %134 : vector<4xf32> to vector<4x1xf32>
    %136 = arith.mulf %133, %131 : vector<4x324xf32>
    %cst_111 = arith.constant dense<0.000000e+00> : vector<4xf32>
    %137 = vector.multi_reduction <add>, %136, %cst_111 [1] : vector<4x324xf32> to vector<4xf32>
    %138 = vector.shape_cast %137 : vector<4xf32> to vector<4x1xf32>
    %cst_112 = arith.constant 3.906250e-03 : f32
    %139 = vector.broadcast %cst_112 : f32 to vector<4x1xf32>
    %140 = arith.mulf %135, %139 : vector<4x1xf32>
    %cst_113 = arith.constant 3.906250e-03 : f32
    %141 = vector.broadcast %cst_113 : f32 to vector<4x1xf32>
    %142 = arith.mulf %138, %141 : vector<4x1xf32>
    %143 = arith.mulf %140, %140 : vector<4x1xf32>
    %144 = arith.subf %142, %143 : vector<4x1xf32>
    %cst_114 = arith.constant 9.99999974E-6 : f32
    %145 = vector.broadcast %cst_114 : f32 to vector<4x1xf32>
    %146 = arith.addf %144, %145 : vector<4x1xf32>
    %147 = math.rsqrt %146 : vector<4x1xf32>
    %c0_115 = arith.constant 0 : index
    %c0_116 = arith.constant 0 : index
    %148 = vector.load %arg6[%c0_115, %c0_116] : memref<4x1xf32, #tpu.memory_space<vmem>>, vector<4x1xf32>
    %149 = arith.mulf %147, %148 : vector<4x1xf32>
    %150 = vector.broadcast %140 : vector<4x1xf32> to vector<4x324xf32>
    %151 = arith.subf %131, %150 : vector<4x324xf32>
    %152 = vector.broadcast %149 : vector<4x1xf32> to vector<4x324xf32>
    %153 = arith.mulf %151, %152 : vector<4x324xf32>
    %c0_117 = arith.constant 0 : index
    %c0_118 = arith.constant 0 : index
    %154 = vector.load %arg7[%c0_117, %c0_118] : memref<4x1xf32, #tpu.memory_space<vmem>>, vector<4x1xf32>
    %155 = vector.broadcast %154 : vector<4x1xf32> to vector<4x324xf32>
    %156 = arith.addf %153, %155 : vector<4x324xf32>
    %cst_119 = arith.constant 0.000000e+00 : f32
    %157 = vector.broadcast %cst_119 : f32 to vector<4x324xf32>
    %158 = arith.cmpf oge, %156, %157 : vector<4x324xf32>
    %cst_120 = arith.constant 0.00999999977 : f32
    %159 = vector.broadcast %cst_120 : f32 to vector<4x324xf32>
    %160 = arith.mulf %159, %156 : vector<4x324xf32>
    %161 = arith.select %158, %156, %160 : vector<4x324xi1>, vector<4x324xf32>
    %c0_121 = arith.constant 0 : index
    %c0_122 = arith.constant 0 : index
    %c0_123 = arith.constant 0 : index
    %162 = vector.load %arg9[%c0_121, %c0_122, %c0_123] : memref<1x4x324xf32, #tpu.memory_space<vmem>>, vector<1x4x324xf32>
    %163 = vector.shape_cast %162 : vector<1x4x324xf32> to vector<4x324xf32>
    %164 = vector.shape_cast %161 : vector<4x324xf32> to vector<1x4x324xf32>
    tpu.vector_store %arg9[%c0_121, %c0_122, %c0_123], %164 {strides = array<i32>} : memref<1x4x324xf32, #tpu.memory_space<vmem>>, vector<1x4x324xf32>,
    return
  }
  func.func @transform_0(%arg0: i32) -> (i32, i32, i32) {
    %c0_i32 = arith.constant 0 : i32
    %c0_i32_0 = arith.constant 0 : i32
    %c0_i32_1 = arith.constant 0 : i32
    return %arg0, %c0_i32, %c0_i32_0 : i32, i32, i32
  }
  func.func @transform_1(%arg0: i32) -> (i32, i32, i32, i32) {
    %c0_i32 = arith.constant 0 : i32
    %c0_i32_0 = arith.constant 0 : i32
    %c0_i32_1 = arith.constant 0 : i32
    %c0_i32_2 = arith.constant 0 : i32
    %c0_i32_3 = arith.constant 0 : i32
    return %c0_i32, %c0_i32_0, %c0_i32_1, %c0_i32_2 : i32, i32, i32, i32
  }
  func.func @transform_2(%arg0: i32) -> (i32, i32) {
    %c0_i32 = arith.constant 0 : i32
    %c0_i32_0 = arith.constant 0 : i32
    %c0_i32_1 = arith.constant 0 : i32
    return %c0_i32, %c0_i32_0 : i32, i32
  }
  func.func @transform_3(%arg0: i32) -> (i32, i32) {
    %c0_i32 = arith.constant 0 : i32
    %c0_i32_0 = arith.constant 0 : i32
    %c0_i32_1 = arith.constant 0 : i32
    return %c0_i32, %c0_i32_0 : i32, i32
  }
  func.func @transform_4(%arg0: i32) -> (i32, i32, i32, i32) {
    %c0_i32 = arith.constant 0 : i32
    %c0_i32_0 = arith.constant 0 : i32
    %c0_i32_1 = arith.constant 0 : i32
    %c0_i32_2 = arith.constant 0 : i32
    %c0_i32_3 = arith.constant 0 : i32
    return %c0_i32, %c0_i32_0, %c0_i32_1, %c0_i32_2 : i32, i32, i32, i32
  }
  func.func @transform_5(%arg0: i32) -> (i32, i32) {
    %c0_i32 = arith.constant 0 : i32
    %c0_i32_0 = arith.constant 0 : i32
    %c0_i32_1 = arith.constant 0 : i32
    return %c0_i32, %c0_i32_0 : i32, i32
  }
  func.func @transform_6(%arg0: i32) -> (i32, i32) {
    %c0_i32 = arith.constant 0 : i32
    %c0_i32_0 = arith.constant 0 : i32
    %c0_i32_1 = arith.constant 0 : i32
    return %c0_i32, %c0_i32_0 : i32, i32
  }
  func.func @transform_7(%arg0: i32) -> (i32, i32) {
    %c0_i32 = arith.constant 0 : i32
    %c0_i32_0 = arith.constant 0 : i32
    %c0_i32_1 = arith.constant 0 : i32
    return %c0_i32, %c0_i32_0 : i32, i32
  }
  func.func @transform_8(%arg0: i32) -> (i32, i32, i32) {
    %c0_i32 = arith.constant 0 : i32
    %c0_i32_0 = arith.constant 0 : i32
    %c0_i32_1 = arith.constant 0 : i32
    return %arg0, %c0_i32, %c0_i32_0 : i32, i32, i32
  }
}

</mosaic_0001>

<llo_original>
// kernel: up_forward.1
$region0: #{up_forward.1}
  #allocation0 [shape = 'u32[]', space=smem, size = 0x4, offset = 0x4, fixed_abs, tag = 'smem constant byte address 0x4 - core index']
  #allocation1 [shape = 'u32[144,128]{1,0:T(1,128)}', space=vmem, size = 0x12000, scoped, tag = 'internal scratch']
  #allocation2 [shape = 'bf16[4,362]{1,0:T(4,128)(2,1)}', space=vmem, size = 0xc00, scoped, tag = 'scratch operand']
  %s0 = inlined_call_operand.vmem [shape: bf16[2,8,362], index: 0, kind: input, shape index: {}]
  %s1 = inlined_call_operand.vmem [shape: bf16[3,3,4,8], index: 1, kind: input, shape index: {}]
  %s2 = inlined_call_operand.vmem [shape: f32[4,1], index: 2, kind: input, shape index: {}]
  %s3 = inlined_call_operand.vmem [shape: f32[4,1], index: 3, kind: input, shape index: {}]
  %s4 = inlined_call_operand.vmem [shape: bf16[3,3,4,4], index: 4, kind: input, shape index: {}]
  %s5 = inlined_call_operand.vmem [shape: f32[4,1], index: 5, kind: input, shape index: {}]
  %s6 = inlined_call_operand.vmem [shape: f32[4,1], index: 6, kind: input, shape index: {}]
  %s7 = inlined_call_operand.vmem [shape: f32[1,324], index: 7, kind: input, shape index: {}]
  %s8 = inlined_call_operand.vmem [shape: f32[2,4,324], index: 8, kind: output, shape index: {}]
  %s9 = sld [smem:[#allocation0]]
  $region65: #{up_forward.1} parent=0
    _
  %s11 = ssub.s32 1, %s9
  %s12 = scalar_select 0, %s11, %s9
  loop: start=0, step=1, limit=4
  $region2: #{up_forward.1} parent=0 // loop_pre_header
    _
  $region3: #{up_forward.1} parent=0 // loop_header
    %s14 = sphi 0, %s18
    %p15 = scmp.ge.s32.totalorder %s14, 4
    %s24 = sphi 0, %s26
    %s27 = sphi 0, %s24
    %s28 = sphi 0, %s27
    %s44 = sphi 0, %s28
    %s48 = sphi 0, %s48
    %s50 = sphi 0, %s48
    %s51 = sphi 0, %s50
    %s65 = sphi 0, %s51
    %s69 = sphi 0, %s69
    %s71 = sphi 0, %s69
    %s72 = sphi 0, %s71
    %s86 = sphi 0, %s72
    %s90 = sphi 0, %s90
    %s92 = sphi 0, %s90
    %s93 = sphi 0, %s92
    %s107 = sphi 0, %s93
    %s111 = sphi 0, %s111
    %s113 = sphi 0, %s111
    %s114 = sphi 0, %s113
    %s128 = sphi 0, %s114
    %s132 = sphi 0, %s132
    %s134 = sphi 0, %s132
    %s135 = sphi 0, %s134
    %s149 = sphi 0, %s135
    %s153 = sphi 0, %s153
    %s155 = sphi 0, %s153
    %s156 = sphi 0, %s155
    %s170 = sphi 0, %s156
    %s174 = sphi 0, %s174
    %s176 = sphi 0, %s174
    %s177 = sphi 0, %s176
    %s191 = sphi 0, %s177
    %s197 = sphi 0, %s199
    %s200 = sphi 0, %s197
    %s201 = sphi 0, %s200
    %s217 = sphi 0, %s201
  $region4: #{up_forward.1} parent=0 // loop_header_branch
    %17 = sbr.rel (%p15) target = $region8
  $region5: #{up_forward.1} parent=0 // loop_body
    %s19 = ssub.s32 %s14, 1
    %s20 = ssub.s32 %s14, 2
    %s21 = sadd.s32 %s14, 1
    %s22 = ssub.s32 %s14, %s21
    %p23 = scmp.eq.s32.totalorder %s22, 0
    %s25 = sadd.s32 %s24, 1
    %s26 = scalar_select %p23, %s24, %s25
    %p29 = pneg %p23
    %p30 = scmp.eq.s32.totalorder %s14, 1
    %p31 = por %p29, %p30
    %p32 = scmp.ne.s32.totalorder %s24, %s27
    %p33 = scmp.eq.s32.totalorder %s14, 0
    %p34 = por %p32, %p33
    %p35 = scmp.ne.s32.totalorder %s24, %s27
    %p36 = scmp.eq.s32.totalorder %s19, 1
    %p37 = por %p35, %p36
    %p38 = scmp.ne.s32.totalorder %s27, %s28
    %p39 = scmp.eq.s32.totalorder %s19, 0
    %p40 = por %p38, %p39
    %p41 = scmp.ne.s32.totalorder %s27, %s28
    %p42 = scmp.eq.s32.totalorder %s20, 1
    %p43 = por %p41, %p42
    %p45 = scmp.ne.s32.totalorder %s28, %s44
    %p46 = scmp.eq.s32.totalorder %s20, 0
    %p47 = por %p45, %p46
    %s49 = sadd.s32 %s48, 1
    %p52 = scmp.eq.s32.totalorder %s14, 1
    %p53 = scmp.ne.s32.totalorder %s48, %s50
    %p54 = scmp.eq.s32.totalorder %s14, 0
    %p55 = por %p53, %p54
    %p56 = scmp.ne.s32.totalorder %s48, %s50
    %p57 = scmp.eq.s32.totalorder %s19, 1
    %p58 = por %p56, %p57
    %p59 = scmp.ne.s32.totalorder %s50, %s51
    %p60 = scmp.eq.s32.totalorder %s19, 0
    %p61 = por %p59, %p60
    %p62 = scmp.ne.s32.totalorder %s50, %s51
    %p63 = scmp.eq.s32.totalorder %s20, 1
    %p64 = por %p62, %p63
    %p66 = scmp.ne.s32.totalorder %s51, %s65
    %p67 = scmp.eq.s32.totalorder %s20, 0
    %p68 = por %p66, %p67
    %s70 = sadd.s32 %s69, 1
    %p73 = scmp.eq.s32.totalorder %s14, 1
    %p74 = scmp.ne.s32.totalorder %s69, %s71
    %p75 = scmp.eq.s32.totalorder %s14, 0
    %p76 = por %p74, %p75
    %p77 = scmp.ne.s32.totalorder %s69, %s71
    %p78 = scmp.eq.s32.totalorder %s19, 1
    %p79 = por %p77, %p78
    %p80 = scmp.ne.s32.totalorder %s71, %s72
    %p81 = scmp.eq.s32.totalorder %s19, 0
    %p82 = por %p80, %p81
    %p83 = scmp.ne.s32.totalorder %s71, %s72
    %p84 = scmp.eq.s32.totalorder %s20, 1
    %p85 = por %p83, %p84
    %p87 = scmp.ne.s32.totalorder %s72, %s86
    %p88 = scmp.eq.s32.totalorder %s20, 0
    %p89 = por %p87, %p88
    %s91 = sadd.s32 %s90, 1
    %p94 = scmp.eq.s32.totalorder %s14, 1
    %p95 = scmp.ne.s32.totalorder %s90, %s92
    %p96 = scmp.eq.s32.totalorder %s14, 0
    %p97 = por %p95, %p96
    %p98 = scmp.ne.s32.totalorder %s90, %s92
    %p99 = scmp.eq.s32.totalorder %s19, 1
    %p100 = por %p98, %p99
    %p101 = scmp.ne.s32.totalorder %s92, %s93
    %p102 = scmp.eq.s32.totalorder %s19, 0
    %p103 = por %p101, %p102
    %p104 = scmp.ne.s32.totalorder %s92, %s93
    %p105 = scmp.eq.s32.totalorder %s20, 1
    %p106 = por %p104, %p105
    %p108 = scmp.ne.s32.totalorder %s93, %s107
    %p109 = scmp.eq.s32.totalorder %s20, 0
    %p110 = por %p108, %p109
    %s112 = sadd.s32 %s111, 1
    %p115 = scmp.eq.s32.totalorder %s14, 1
    %p116 = scmp.ne.s32.totalorder %s111, %s113
    %p117 = scmp.eq.s32.totalorder %s14, 0
    %p118 = por %p116, %p117
    %p119 = scmp.ne.s32.totalorder %s111, %s113
    %p120 = scmp.eq.s32.totalorder %s19, 1
    %p121 = por %p119, %p120
    %p122 = scmp.ne.s32.totalorder %s113, %s114
    %p123 = scmp.eq.s32.totalorder %s19, 0
    %p124 = por %p122, %p123
    %p125 = scmp.ne.s32.totalorder %s113, %s114
    %p126 = scmp.eq.s32.totalorder %s20, 1
    %p127 = por %p125, %p126
    %p129 = scmp.ne.s32.totalorder %s114, %s128
    %p130 = scmp.eq.s32.totalorder %s20, 0
    %p131 = por %p129, %p130
    %s133 = sadd.s32 %s132, 1
    %p136 = scmp.eq.s32.totalorder %s14, 1
    %p137 = scmp.ne.s32.totalorder %s132, %s134
    %p138 = scmp.eq.s32.totalorder %s14, 0
    %p139 = por %p137, %p138
    %p140 = scmp.ne.s32.totalorder %s132, %s134
    %p141 = scmp.eq.s32.totalorder %s19, 1
    %p142 = por %p140, %p141
    %p143 = scmp.ne.s32.totalorder %s134, %s135
    %p144 = scmp.eq.s32.totalorder %s19, 0
    %p145 = por %p143, %p144
    %p146 = scmp.ne.s32.totalorder %s134, %s135
    %p147 = scmp.eq.s32.totalorder %s20, 1
    %p148 = por %p146, %p147
    %p150 = scmp.ne.s32.totalorder %s135, %s149
    %p151 = scmp.eq.s32.totalorder %s20, 0
    %p152 = por %p150, %p151
    %s154 = sadd.s32 %s153, 1
    %p157 = scmp.eq.s32.totalorder %s14, 1
    %p158 = scmp.ne.s32.totalorder %s153, %s155
    %p159 = scmp.eq.s32.totalorder %s14, 0
    %p160 = por %p158, %p159
    %p161 = scmp.ne.s32.totalorder %s153, %s155
    %p162 = scmp.eq.s32.totalorder %s19, 1
    %p163 = por %p161, %p162
    %p164 = scmp.ne.s32.totalorder %s155, %s156
    %p165 = scmp.eq.s32.totalorder %s19, 0
    %p166 = por %p164, %p165
    %p167 = scmp.ne.s32.totalorder %s155, %s156
    %p168 = scmp.eq.s32.totalorder %s20, 1
    %p169 = por %p167, %p168
    %p171 = scmp.ne.s32.totalorder %s156, %s170
    %p172 = scmp.eq.s32.totalorder %s20, 0
    %p173 = por %p171, %p172
    %s175 = sadd.s32 %s174, 1
    %p178 = scmp.eq.s32.totalorder %s14, 1
    %p179 = scmp.ne.s32.totalorder %s174, %s176
    %p180 = scmp.eq.s32.totalorder %s14, 0
    %p181 = por %p179, %p180
    %p182 = scmp.ne.s32.totalorder %s174, %s176
    %p183 = scmp.eq.s32.totalorder %s19, 1
    %p184 = por %p182, %p183
    %p185 = scmp.ne.s32.totalorder %s176, %s177
    %p186 = scmp.eq.s32.totalorder %s19, 0
    %p187 = por %p185, %p186
    %p188 = scmp.ne.s32.totalorder %s176, %s177
    %p189 = scmp.eq.s32.totalorder %s20, 1
    %p190 = por %p188, %p189
    %p192 = scmp.ne.s32.totalorder %s177, %s191
    %p193 = scmp.eq.s32.totalorder %s20, 0
    %p194 = por %p192, %p193
    %s195 = ssub.s32 %s14, %s21
    %p196 = scmp.eq.s32.totalorder %s195, 0
    %s198 = sadd.s32 %s197, 1
    %s199 = scalar_select %p196, %s197, %s198
    %p202 = pneg %p196
    %p203 = scmp.eq.s32.totalorder %s14, 1
    %p204 = por %p202, %p203
    %p205 = scmp.ne.s32.totalorder %s197, %s200
    %p206 = scmp.eq.s32.totalorder %s14, 0
    %p207 = por %p205, %p206
    %p208 = scmp.ne.s32.totalorder %s197, %s200
    %p209 = scmp.eq.s32.totalorder %s19, 1
    %p210 = por %p208, %p209
    %p211 = scmp.ne.s32.totalorder %s200, %s201
    %p212 = scmp.eq.s32.totalorder %s19, 0
    %p213 = por %p211, %p212
    %p214 = scmp.ne.s32.totalorder %s200, %s201
    %p215 = scmp.eq.s32.totalorder %s20, 1
    %p216 = por %p214, %p215
    %p218 = scmp.ne.s32.totalorder %s201, %s217
    %p219 = scmp.eq.s32.totalorder %s20, 0
    %p220 = por %p218, %p219
    %p221 = scmp.le.s32.totalorder 1, %s14
    %p222 = scmp.lt.s32.totalorder %s14, 3
    %p223 = pnand %p221, %p222
    %p224 = pneg %p223
    // Predicated region
    $region9: #{up_forward.1} parent=5 // pred_check
      _
    $region10: #{up_forward.1} parent=5 // pred_check_branch
      %226 = sbr.rel (%p223) target = $region12
    $region11: #{up_forward.1} parent=5 // pred_region
      %s227 = ssub.s32 %s14, 1
      // Predicated region
      $region13: #{up_forward.1} parent=11 // pred_check
        %p228 = pneg %p61
      $region14: #{up_forward.1} parent=11 // pred_check_branch
        %230 = sbr.rel (%p228) target = $region16
      $region15: #{up_forward.1} parent=11 // pred_region
        _
      $region16: #{up_forward.1} parent=11 // pred_fallthru
        _
      // Predicated region
      $region17: #{up_forward.1} parent=11 // pred_check
        %p231 = pneg %p82
      $region18: #{up_forward.1} parent=11 // pred_check_branch
        %233 = sbr.rel (%p231) target = $region20
      $region19: #{up_forward.1} parent=11 // pred_region
        _
      $region20: #{up_forward.1} parent=11 // pred_fallthru
        _
      // Predicated region
      $region21: #{up_forward.1} parent=11 // pred_check
        %p234 = pneg %p103
      $region22: #{up_forward.1} parent=11 // pred_check_branch
        %236 = sbr.rel (%p234) target = $region24
      $region23: #{up_forward.1} parent=11 // pred_region
        _
      $region24: #{up_forward.1} parent=11 // pred_fallthru
        _
      // Predicated region
      $region25: #{up_forward.1} parent=11 // pred_check
        %p237 = pneg %p124
      $region26: #{up_forward.1} parent=11 // pred_check_branch
        %239 = sbr.rel (%p237) target = $region28
      $region27: #{up_forward.1} parent=11 // pred_region
        _
      $region28: #{up_forward.1} parent=11 // pred_fallthru
        _
      // Predicated region
      $region29: #{up_forward.1} parent=11 // pred_check
        %p240 = pneg %p145
      $region30: #{up_forward.1} parent=11 // pred_check_branch
        %242 = sbr.rel (%p240) target = $region32
      $region31: #{up_forward.1} parent=11 // pred_region
        _
      $region32: #{up_forward.1} parent=11 // pred_fallthru
        _
      // Predicated region
      $region33: #{up_forward.1} parent=11 // pred_check
        %p243 = pneg %p166
      $region34: #{up_forward.1} parent=11 // pred_check_branch
        %245 = sbr.rel (%p243) target = $region36
      $region35: #{up_forward.1} parent=11 // pred_region
        _
      $region36: #{up_forward.1} parent=11 // pred_fallthru
        _
      // Predicated region
      $region37: #{up_forward.1} parent=11 // pred_check
        %p246 = pneg %p187
      $region38: #{up_forward.1} parent=11 // pred_check_branch
        %248 = sbr.rel (%p246) target = $region40
      $region39: #{up_forward.1} parent=11 // pred_region
        _
      $region40: #{up_forward.1} parent=11 // pred_fallthru
        _
    $region12: #{up_forward.1} parent=5 // pred_fallthru
      _
    %p249 = scmp.lt.s32.totalorder %s14, 2
    // Predicated region
    $region41: #{up_forward.1} parent=5 // pred_check
      %p250 = pneg %p249
    $region42: #{up_forward.1} parent=5 // pred_check_branch
      %252 = sbr.rel (%p250) target = $region44
    $region43: #{up_forward.1} parent=5 // pred_region
      // Predicated region
      $region45: #{up_forward.1} parent=43 // pred_check
        %p253 = pneg %p34
      $region46: #{up_forward.1} parent=43 // pred_check_branch
        %255 = sbr.rel (%p253) target = $region48
      $region47: #{up_forward.1} parent=43 // pred_region
        %p256 = scmp.lt.s32.totalorder %s14, 1
        %s257 = scalar_select %p256, %s14, 1
        %s258 = smul.addr %s257, 3
        %s259 = smul.addr %s258, 4
        %s260 = scalar_lea.vmem %s0, %s259
      $region48: #{up_forward.1} parent=43 // pred_fallthru
        _
    $region44: #{up_forward.1} parent=5 // pred_fallthru
      _
    %p261 = scmp.le.s32.totalorder 1, %s14
    %p262 = scmp.lt.s32.totalorder %s14, 3
    %p263 = pnand %p261, %p262
    %p264 = pneg %p263
    // Predicated region
    $region49: #{up_forward.1} parent=5 // pred_check
      _
    $region50: #{up_forward.1} parent=5 // pred_check_branch
      %266 = sbr.rel (%p263) target = $region52
    $region51: #{up_forward.1} parent=5 // pred_region
      %s267 = ssub.s32 %s14, 1
      %p268 = scmp.lt.s32.totalorder %s19, 1
      %s269 = scalar_select %p268, %s19, 1
      %s270 = smul.addr %s269, 3
      %s271 = smul.addr %s270, 4
      %s272 = scalar_lea.vmem %s0, %s271
      %p273 = pneg %p40
      %p274 = pneg %p37
      %p275 = pneg %p61
      %p276 = pneg %p58
      %p277 = pneg %p82
      %p278 = pneg %p79
      %p279 = pneg %p103
      %p280 = pneg %p100
      %p281 = pneg %p124
      %p282 = pneg %p121
      %p283 = pneg %p145
      %p284 = pneg %p142
      %p285 = pneg %p166
      %p286 = pneg %p163
      %p287 = pneg %p187
      %p288 = pneg %p184
      %p289 = pneg %p213
      %p290 = pneg %p210
      %p291 = scmp.lt.s32.totalorder %s19, 1
      %s292 = scalar_select %p291, %s19, 1
      %s293 = smul.addr %s292, 3
      %s294 = smul.addr %s293, 4
      %s295 = scalar_lea.vmem %s8, %s294
      %p296 = scmp.lt.s32.totalorder %s19, 1
      %s297 = scalar_select %p296, %s19, 1
      %s298 = smul.addr %s297, 3
      %s299 = smul.addr %s298, 4
      %s300 = scalar_lea.vmem %s0, %s299
      %p301 = scmp.lt.s32.totalorder %s19, 1
      %s302 = scalar_select %p301, %s19, 1
      %s303 = smul.addr %s302, 3
      %s304 = smul.addr %s303, 4
      %s305 = scalar_lea.vmem %s8, %s304
      %v307 = vld [vmem:[%s7] sm:$0x7]
      %v308 = vld [vmem:[%s300] sm:$0xff]
      %v309 = vld [vmem:[%s300 + $0x8] sm:$0xf]
      %v310 = vld [vmem:[%s1] sm:$0x3]
      %s311 = scalar_lea.vmem %s1, 2
      %v312 = vld [vmem:[%s311] sm:$0x3]
      %v315 = vunpack.c.l.b16 %v308
      %v316 = vunpack.c.h.b16 %v308
      %v317 = vunpack.c.l.b16 %v309
      %v318 = vpack.c.b16 %v315, %v315
      %v319 = vpack.c.b16 %v316, %v316
      %v320 = vpack.c.b16 %v317, %v317
      %321 = vrot.lane.b32.xlu0 %v318, 127
      %v322 = vpop.permute.xlu0 %321
      %323 = vrot.lane.b32.xlu0 %v319, 127
      %v324 = vpop.permute.xlu0 %323
      %325 = vrot.lane.b32.xlu0 %v320, 127
      %v326 = vpop.permute.xlu0 %325
      %vm327 = vcmask 1039360
      %v328 = vsel %vm327, %v322, %v324
      %v329 = vsel %vm327, %v324, %v326
      %vm330 = vcmask 64512
      %v332 = vsel %vm330, %v312, 0
      %vm334 = vcmask 1043456
      %v336 = vsel %vm334, %v328, 0
      %v339 = vsel %vm334, %v329, 0
      %v342 = vsel %vm334, %v326, 0
      %344 = vmatprep.subr.bf16.mxu0 %v339
      %345 = vmatpush1.bf16.msra.mxu0 %v336
      %346 = vmatprep.subr.bf16.mxu0 0
      %347 = vmatpush1.bf16.msra.mxu0 0
      %348 = vmatprep.subr.bf16.mxu0 0
      %349 = vmatpush1.bf16.msra.mxu0 0
      %350 = vmatprep.subr.bf16.mxu0 0
      %351 = vmatpush1.bf16.msra.mxu0 0
      %352 = vmatprep.subr.bf16.mxu0 0
      %353 = vmatpush1.bf16.msra.mxu0 0
      %354 = vmatprep.subr.bf16.mxu0 0
      %355 = vmatpush1.bf16.msra.mxu0 0
      %356 = vmatprep.subr.bf16.mxu0 0
      %357 = vmatpush1.bf16.msra.mxu0 0
      %358 = vmatprep.subr.bf16.mxu0 0
      %359 = vmatpush1.bf16.msra.mxu0 0
      %360 = vmatprep.subr.bf16.mxu0 0
      %361 = vmatpush1.bf16.msra.mxu0 0
      %362 = vmatprep.subr.bf16.mxu0 0
      %363 = vmatpush1.bf16.msra.mxu0 0
      %364 = vmatprep.subr.bf16.mxu0 0
      %365 = vmatpush1.bf16.msra.mxu0 0
      %366 = vmatprep.subr.bf16.mxu0 0
      %367 = vmatpush1.bf16.msra.mxu0 0
      %368 = vmatprep.subr.bf16.mxu0 0
      %369 = vmatpush1.bf16.msra.mxu0 0
      %370 = vmatprep.subr.bf16.mxu0 0
      %371 = vmatpush1.bf16.msra.mxu0 0
      %372 = vmatprep.subr.bf16.mxu0 0
      %373 = vmatpush1.bf16.msra.mxu0 0
      %374 = vmatprep.subr.bf16.mxu0 0
      %375 = vmatpush1.bf16.msra.mxu0 0
      %376 = vmatprep.mubr.bf16.mxu0 0
      %377 = vmatmul.mubr.bf16.gmra.mrb[0].mxu0 %v332
      %v378 = vpop.f32.mrb[0].mxu0
      %v379 = vadd.f32 0.0, %v378
      %v380 = vpop.f32.mrb[0].mxu0
      %v381 = vadd.f32 0.0, %v380
      %v382 = vpop.f32.mrb[0].mxu0
      %v383 = vpop.f32.mrb[0].mxu0
      %384 = vdwg.mxu0
      %385 = vmatprep.subr.bf16.mxu0 0
      %386 = vmatpush1.bf16.msra.mxu0 %v342
      %387 = vmatprep.subr.bf16.mxu0 0
      %388 = vmatpush1.bf16.msra.mxu0 0
      %389 = vmatprep.subr.bf16.mxu0 0
      %390 = vmatpush1.bf16.msra.mxu0 0
      %391 = vmatprep.subr.bf16.mxu0 0
      %392 = vmatpush1.bf16.msra.mxu0 0
      %393 = vmatprep.subr.bf16.mxu0 0
      %394 = vmatpush1.bf16.msra.mxu0 0
      %395 = vmatprep.subr.bf16.mxu0 0
      %396 = vmatpush1.bf16.msra.mxu0 0
      %397 = vmatprep.subr.bf16.mxu0 0
      %398 = vmatpush1.bf16.msra.mxu0 0
      %399 = vmatprep.subr.bf16.mxu0 0
      %400 = vmatpush1.bf16.msra.mxu0 0
      %401 = vmatprep.subr.bf16.mxu0 0
      %402 = vmatpush1.bf16.msra.mxu0 0
      %403 = vmatprep.subr.bf16.mxu0 0
      %404 = vmatpush1.bf16.msra.mxu0 0
      %405 = vmatprep.subr.bf16.mxu0 0
      %406 = vmatpush1.bf16.msra.mxu0 0
      %407 = vmatprep.subr.bf16.mxu0 0
      %408 = vmatpush1.bf16.msra.mxu0 0
      %409 = vmatprep.subr.bf16.mxu0 0
      %410 = vmatpush1.bf16.msra.mxu0 0
      %411 = vmatprep.subr.bf16.mxu0 0
      %412 = vmatpush1.bf16.msra.mxu0 0
      %413 = vmatprep.subr.bf16.mxu0 0
      %414 = vmatpush1.bf16.msra.mxu0 0
      %415 = vmatprep.subr.bf16.mxu0 0
      %416 = vmatpush1.bf16.msra.mxu0 0
      %417 = vmatprep.mubr.bf16.mxu0 0
      %418 = vmatmul.mubr.bf16.gmra.mrb[0].mxu0 %v332
      %v419 = vpop.f32.mrb[0].mxu0
      %v420 = vadd.f32 0.0, %v419
      %v421 = vpop.f32.mrb[0].mxu0
      %v422 = vpop.f32.mrb[0].mxu0
      %v423 = vpop.f32.mrb[0].mxu0
      %424 = vdwg.mxu0
      %v426 = vsel %vm330, %v310, 0
      %v429 = vsel %vm334, %v318, 0
      %v432 = vsel %vm334, %v319, 0
      %v435 = vsel %vm334, %v320, 0
      %437 = vmatprep.subr.bf16.mxu0 %v432
      %438 = vmatpush1.bf16.msra.mxu0 %v429
      %439 = vmatprep.subr.bf16.mxu0 0
      %440 = vmatpush1.bf16.msra.mxu0 0
      %441 = vmatprep.subr.bf16.mxu0 0
      %442 = vmatpush1.bf16.msra.mxu0 0
      %443 = vmatprep.subr.bf16.mxu0 0
      %444 = vmatpush1.bf16.msra.mxu0 0
      %445 = vmatprep.subr.bf16.mxu0 0
      %446 = vmatpush1.bf16.msra.mxu0 0
      %447 = vmatprep.subr.bf16.mxu0 0
      %448 = vmatpush1.bf16.msra.mxu0 0
      %449 = vmatprep.subr.bf16.mxu0 0
      %450 = vmatpush1.bf16.msra.mxu0 0
      %451 = vmatprep.subr.bf16.mxu0 0
      %452 = vmatpush1.bf16.msra.mxu0 0
      %453 = vmatprep.subr.bf16.mxu0 0
      %454 = vmatpush1.bf16.msra.mxu0 0
      %455 = vmatprep.subr.bf16.mxu0 0
      %456 = vmatpush1.bf16.msra.mxu0 0
      %457 = vmatprep.subr.bf16.mxu0 0
      %458 = vmatpush1.bf16.msra.mxu0 0
      %459 = vmatprep.subr.bf16.mxu0 0
      %460 = vmatpush1.bf16.msra.mxu0 0
      %461 = vmatprep.subr.bf16.mxu0 0
      %462 = vmatpush1.bf16.msra.mxu0 0
      %463 = vmatprep.subr.bf16.mxu0 0
      %464 = vmatpush1.bf16.msra.mxu0 0
      %465 = vmatprep.subr.bf16.mxu0 0
      %466 = vmatpush1.bf16.msra.mxu0 0
      %467 = vmatprep.subr.bf16.mxu0 0
      %468 = vmatpush1.bf16.msra.mxu0 0
      %469 = vmatprep.mubr.bf16.mxu0 0
      %470 = vmatmul.mubr.bf16.gmra.mrb[0].mxu0 %v426
      %v471 = vpop.f32.mrb[0].mxu0
      %v472 = vadd.f32 %v379, %v471
      %v473 = vpop.f32.mrb[0].mxu0
      %v474 = vadd.f32 %v381, %v473
      %v475 = vpop.f32.mrb[0].mxu0
      %v476 = vpop.f32.mrb[0].mxu0
      %477 = vdwg.mxu0
      %478 = vmatprep.subr.bf16.mxu0 0
      %479 = vmatpush1.bf16.msra.mxu0 %v435
      %480 = vmatprep.subr.bf16.mxu0 0
      %481 = vmatpush1.bf16.msra.mxu0 0
      %482 = vmatprep.subr.bf16.mxu0 0
      %483 = vmatpush1.bf16.msra.mxu0 0
      %484 = vmatprep.subr.bf16.mxu0 0
      %485 = vmatpush1.bf16.msra.mxu0 0
      %486 = vmatprep.subr.bf16.mxu0 0
      %487 = vmatpush1.bf16.msra.mxu0 0
      %488 = vmatprep.subr.bf16.mxu0 0
      %489 = vmatpush1.bf16.msra.mxu0 0
      %490 = vmatprep.subr.bf16.mxu0 0
      %491 = vmatpush1.bf16.msra.mxu0 0
      %492 = vmatprep.subr.bf16.mxu0 0
      %493 = vmatpush1.bf16.msra.mxu0 0
      %494 = vmatprep.subr.bf16.mxu0 0
      %495 = vmatpush1.bf16.msra.mxu0 0
      %496 = vmatprep.subr.bf16.mxu0 0
      %497 = vmatpush1.bf16.msra.mxu0 0
      %498 = vmatprep.subr.bf16.mxu0 0
      %499 = vmatpush1.bf16.msra.mxu0 0
      %500 = vmatprep.subr.bf16.mxu0 0
      %501 = vmatpush1.bf16.msra.mxu0 0
      %502 = vmatprep.subr.bf16.mxu0 0
      %503 = vmatpush1.bf16.msra.mxu0 0
      %504 = vmatprep.subr.bf16.mxu0 0
      %505 = vmatpush1.bf16.msra.mxu0 0
      %506 = vmatprep.subr.bf16.mxu0 0
      %507 = vmatpush1.bf16.msra.mxu0 0
      %508 = vmatprep.subr.bf16.mxu0 0
      %509 = vmatpush1.bf16.msra.mxu0 0
      %510 = vmatprep.mubr.bf16.mxu0 0
      %511 = vmatmul.mubr.bf16.gmra.mrb[0].mxu0 %v426
      %v512 = vpop.f32.mrb[0].mxu0
      %v513 = vadd.f32 %v420, %v512
      %v514 = vpop.f32.mrb[0].mxu0
      %v515 = vpop.f32.mrb[0].mxu0
      %v516 = vpop.f32.mrb[0].mxu0
      %517 = vdwg.mxu0
      %s518 = scalar_lea.vmem %s1, 4
      %v519 = vld [vmem:[%s518] sm:$0x3]
      %520 = vrot.lane.b32.xlu0 %v318, 126
      %v521 = vpop.permute.xlu0 %520
      %522 = vrot.lane.b32.xlu0 %v319, 126
      %v523 = vpop.permute.xlu0 %522
      %524 = vrot.lane.b32.xlu0 %v320, 126
      %v525 = vpop.permute.xlu0 %524
      %vm526 = vcmask 1031168
      %v527 = vsel %vm526, %v521, %v523
      %v528 = vsel %vm526, %v523, %v525
      %v530 = vsel %vm330, %v519, 0
      %v533 = vsel %vm334, %v527, 0
      %v536 = vsel %vm334, %v528, 0
      %v539 = vsel %vm334, %v525, 0
      %541 = vmatprep.subr.bf16.mxu0 %v536
      %542 = vmatpush1.bf16.msra.mxu0 %v533
      %543 = vmatprep.subr.bf16.mxu0 0
      %544 = vmatpush1.bf16.msra.mxu0 0
      %545 = vmatprep.subr.bf16.mxu0 0
      %546 = vmatpush1.bf16.msra.mxu0 0
      %547 = vmatprep.subr.bf16.mxu0 0
      %548 = vmatpush1.bf16.msra.mxu0 0
      %549 = vmatprep.subr.bf16.mxu0 0
      %550 = vmatpush1.bf16.msra.mxu0 0
      %551 = vmatprep.subr.bf16.mxu0 0
      %552 = vmatpush1.bf16.msra.mxu0 0
      %553 = vmatprep.subr.bf16.mxu0 0
      %554 = vmatpush1.bf16.msra.mxu0 0
      %555 = vmatprep.subr.bf16.mxu0 0
      %556 = vmatpush1.bf16.msra.mxu0 0
      %557 = vmatprep.subr.bf16.mxu0 0
      %558 = vmatpush1.bf16.msra.mxu0 0
      %559 = vmatprep.subr.bf16.mxu0 0
      %560 = vmatpush1.bf16.msra.mxu0 0
      %561 = vmatprep.subr.bf16.mxu0 0
      %562 = vmatpush1.bf16.msra.mxu0 0
      %563 = vmatprep.subr.bf16.mxu0 0
      %564 = vmatpush1.bf16.msra.mxu0 0
      %565 = vmatprep.subr.bf16.mxu0 0
      %566 = vmatpush1.bf16.msra.mxu0 0
      %567 = vmatprep.subr.bf16.mxu0 0
      %568 = vmatpush1.bf16.msra.mxu0 0
      %569 = vmatprep.subr.bf16.mxu0 0
      %570 = vmatpush1.bf16.msra.mxu0 0
      %571 = vmatprep.subr.bf16.mxu0 0
      %572 = vmatpush1.bf16.msra.mxu0 0
      %573 = vmatprep.mubr.bf16.mxu0 0
      %574 = vmatmul.mubr.bf16.gmra.mrb[0].mxu0 %v530
      %v575 = vpop.f32.mrb[0].mxu0
      %v576 = vadd.f32 0.0, %v575
      %v577 = vpop.f32.mrb[0].mxu0
      %v578 = vadd.f32 0.0, %v577
      %v579 = vpop.f32.mrb[0].mxu0
      %v580 = vpop.f32.mrb[0].mxu0
      %581 = vdwg.mxu0
      %582 = vmatprep.subr.bf16.mxu0 0
      %583 = vmatpush1.bf16.msra.mxu0 %v539
      %584 = vmatprep.subr.bf16.mxu0 0
      %585 = vmatpush1.bf16.msra.mxu0 0
      %586 = vmatprep.subr.bf16.mxu0 0
      %587 = vmatpush1.bf16.msra.mxu0 0
      %588 = vmatprep.subr.bf16.mxu0 0
      %589 = vmatpush1.bf16.msra.mxu0 0
      %590 = vmatprep.subr.bf16.mxu0 0
      %591 = vmatpush1.bf16.msra.mxu0 0
      %592 = vmatprep.subr.bf16.mxu0 0
      %593 = vmatpush1.bf16.msra.mxu0 0
      %594 = vmatprep.subr.bf16.mxu0 0
      %595 = vmatpush1.bf16.msra.mxu0 0
      %596 = vmatprep.subr.bf16.mxu0 0
      %597 = vmatpush1.bf16.msra.mxu0 0
      %598 = vmatprep.subr.bf16.mxu0 0
      %599 = vmatpush1.bf16.msra.mxu0 0
      %600 = vmatprep.subr.bf16.mxu0 0
      %601 = vmatpush1.bf16.msra.mxu0 0
      %602 = vmatprep.subr.bf16.mxu0 0
      %603 = vmatpush1.bf16.msra.mxu0 0
      %604 = vmatprep.subr.bf16.mxu0 0
      %605 = vmatpush1.bf16.msra.mxu0 0
      %606 = vmatprep.subr.bf16.mxu0 0
      %607 = vmatpush1.bf16.msra.mxu0 0
      %608 = vmatprep.subr.bf16.mxu0 0
      %609 = vmatpush1.bf16.msra.mxu0 0
      %610 = vmatprep.subr.bf16.mxu0 0
      %611 = vmatpush1.bf16.msra.mxu0 0
      %612 = vmatprep.subr.bf16.mxu0 0
      %613 = vmatpush1.bf16.msra.mxu0 0
      %614 = vmatprep.mubr.bf16.mxu0 0
      %615 = vmatmul.mubr.bf16.gmra.mrb[0].mxu0 %v530
      %v616 = vpop.f32.mrb[0].mxu0
      %v617 = vadd.f32 0.0, %v616
      %v618 = vpop.f32.mrb[0].mxu0
      %v619 = vpop.f32.mrb[0].mxu0
      %v620 = vpop.f32.mrb[0].mxu0
      %621 = vdwg.mxu0
      %v622 = vadd.f32 %v472, %v576
      %v623 = vadd.f32 %v474, %v578
      %v624 = vadd.f32 %v513, %v617
      %s625 = scalar_lea.vmem %s1, 6
      %v626 = vld [vmem:[%s625] sm:$0x3]
      %627 = vrot.lane.b32.xlu0 %v318, 110
      %v628 = vpop.permute.xlu0 %627
      %629 = vrot.lane.b32.xlu0 %v319, 110
      %v630 = vpop.permute.xlu0 %629
      %631 = vrot.lane.b32.xlu0 %v320, 110
      %v632 = vpop.permute.xlu0 %631
      %vm633 = vcmask 900096
      %v634 = vsel %vm633, %v628, %v630
      %v635 = vsel %vm633, %v630, %v632
      %v637 = vsel %vm330, %v626, 0
      %v640 = vsel %vm334, %v634, 0
      %v643 = vsel %vm334, %v635, 0
      %v646 = vsel %vm334, %v632, 0
      %648 = vmatprep.subr.bf16.mxu0 %v643
      %649 = vmatpush1.bf16.msra.mxu0 %v640
      %650 = vmatprep.subr.bf16.mxu0 0
      %651 = vmatpush1.bf16.msra.mxu0 0
      %652 = vmatprep.subr.bf16.mxu0 0
      %653 = vmatpush1.bf16.msra.mxu0 0
      %654 = vmatprep.subr.bf16.mxu0 0
      %655 = vmatpush1.bf16.msra.mxu0 0
      %656 = vmatprep.subr.bf16.mxu0 0
      %657 = vmatpush1.bf16.msra.mxu0 0
      %658 = vmatprep.subr.bf16.mxu0 0
      %659 = vmatpush1.bf16.msra.mxu0 0
      %660 = vmatprep.subr.bf16.mxu0 0
      %661 = vmatpush1.bf16.msra.mxu0 0
      %662 = vmatprep.subr.bf16.mxu0 0
      %663 = vmatpush1.bf16.msra.mxu0 0
      %664 = vmatprep.subr.bf16.mxu0 0
      %665 = vmatpush1.bf16.msra.mxu0 0
      %666 = vmatprep.subr.bf16.mxu0 0
      %667 = vmatpush1.bf16.msra.mxu0 0
      %668 = vmatprep.subr.bf16.mxu0 0
      %669 = vmatpush1.bf16.msra.mxu0 0
      %670 = vmatprep.subr.bf16.mxu0 0
      %671 = vmatpush1.bf16.msra.mxu0 0
      %672 = vmatprep.subr.bf16.mxu0 0
      %673 = vmatpush1.bf16.msra.mxu0 0
      %674 = vmatprep.subr.bf16.mxu0 0
      %675 = vmatpush1.bf16.msra.mxu0 0
      %676 = vmatprep.subr.bf16.mxu0 0
      %677 = vmatpush1.bf16.msra.mxu0 0
      %678 = vmatprep.subr.bf16.mxu0 0
      %679 = vmatpush1.bf16.msra.mxu0 0
      %680 = vmatprep.mubr.bf16.mxu0 0
      %681 = vmatmul.mubr.bf16.gmra.mrb[0].mxu0 %v637
      %v682 = vpop.f32.mrb[0].mxu0
      %v683 = vadd.f32 0.0, %v682
      %v684 = vpop.f32.mrb[0].mxu0
      %v685 = vadd.f32 0.0, %v684
      %v686 = vpop.f32.mrb[0].mxu0
      %v687 = vpop.f32.mrb[0].mxu0
      %688 = vdwg.mxu0
      %689 = vmatprep.subr.bf16.mxu0 0
      %690 = vmatpush1.bf16.msra.mxu0 %v646
      %691 = vmatprep.subr.bf16.mxu0 0
      %692 = vmatpush1.bf16.msra.mxu0 0
      %693 = vmatprep.subr.bf16.mxu0 0
      %694 = vmatpush1.bf16.msra.mxu0 0
      %695 = vmatprep.subr.bf16.mxu0 0
      %696 = vmatpush1.bf16.msra.mxu0 0
      %697 = vmatprep.subr.bf16.mxu0 0
      %698 = vmatpush1.bf16.msra.mxu0 0
      %699 = vmatprep.subr.bf16.mxu0 0
      %700 = vmatpush1.bf16.msra.mxu0 0
      %701 = vmatprep.subr.bf16.mxu0 0
      %702 = vmatpush1.bf16.msra.mxu0 0
      %703 = vmatprep.subr.bf16.mxu0 0
      %704 = vmatpush1.bf16.msra.mxu0 0
      %705 = vmatprep.subr.bf16.mxu0 0
      %706 = vmatpush1.bf16.msra.mxu0 0
      %707 = vmatprep.subr.bf16.mxu0 0
      %708 = vmatpush1.bf16.msra.mxu0 0
      %709 = vmatprep.subr.bf16.mxu0 0
      %710 = vmatpush1.bf16.msra.mxu0 0
      %711 = vmatprep.subr.bf16.mxu0 0
      %712 = vmatpush1.bf16.msra.mxu0 0
      %713 = vmatprep.subr.bf16.mxu0 0
      %714 = vmatpush1.bf16.msra.mxu0 0
      %715 = vmatprep.subr.bf16.mxu0 0
      %716 = vmatpush1.bf16.msra.mxu0 0
      %717 = vmatprep.subr.bf16.mxu0 0
      %718 = vmatpush1.bf16.msra.mxu0 0
      %719 = vmatprep.subr.bf16.mxu0 0
      %720 = vmatpush1.bf16.msra.mxu0 0
      %721 = vmatprep.mubr.bf16.mxu0 0
      %722 = vmatmul.mubr.bf16.gmra.mrb[0].mxu0 %v637
      %v723 = vpop.f32.mrb[0].mxu0
      %v724 = vadd.f32 0.0, %v723
      %v725 = vpop.f32.mrb[0].mxu0
      %v726 = vpop.f32.mrb[0].mxu0
      %v727 = vpop.f32.mrb[0].mxu0
      %728 = vdwg.mxu0
      %v729 = vadd.f32 %v622, %v683
      %v730 = vadd.f32 %v623, %v685
      %v731 = vadd.f32 %v624, %v724
      %s732 = scalar_lea.vmem %s1, 8
      %v733 = vld [vmem:[%s732] sm:$0x3]
      %734 = vrot.lane.b32.xlu0 %v318, 109
      %v735 = vpop.permute.xlu0 %734
      %736 = vrot.lane.b32.xlu0 %v319, 109
      %v737 = vpop.permute.xlu0 %736
      %738 = vrot.lane.b32.xlu0 %v320, 109
      %v739 = vpop.permute.xlu0 %738
      %vm740 = vcmask 891904
      %v741 = vsel %vm740, %v735, %v737
      %v742 = vsel %vm740, %v737, %v739
      %v744 = vsel %vm330, %v733, 0
      %v747 = vsel %vm334, %v741, 0
      %v750 = vsel %vm334, %v742, 0
      %v753 = vsel %vm334, %v739, 0
      %755 = vmatprep.subr.bf16.mxu0 %v750
      %756 = vmatpush1.bf16.msra.mxu0 %v747
      %757 = vmatprep.subr.bf16.mxu0 0
      %758 = vmatpush1.bf16.msra.mxu0 0
      %759 = vmatprep.subr.bf16.mxu0 0
      %760 = vmatpush1.bf16.msra.mxu0 0
      %761 = vmatprep.subr.bf16.mxu0 0
      %762 = vmatpush1.bf16.msra.mxu0 0
      %763 = vmatprep.subr.bf16.mxu0 0
      %764 = vmatpush1.bf16.msra.mxu0 0
      %765 = vmatprep.subr.bf16.mxu0 0
      %766 = vmatpush1.bf16.msra.mxu0 0
      %767 = vmatprep.subr.bf16.mxu0 0
      %768 = vmatpush1.bf16.msra.mxu0 0
      %769 = vmatprep.subr.bf16.mxu0 0
      %770 = vmatpush1.bf16.msra.mxu0 0
      %771 = vmatprep.subr.bf16.mxu0 0
      %772 = vmatpush1.bf16.msra.mxu0 0
      %773 = vmatprep.subr.bf16.mxu0 0
      %774 = vmatpush1.bf16.msra.mxu0 0
      %775 = vmatprep.subr.bf16.mxu0 0
      %776 = vmatpush1.bf16.msra.mxu0 0
      %777 = vmatprep.subr.bf16.mxu0 0
      %778 = vmatpush1.bf16.msra.mxu0 0
      %779 = vmatprep.subr.bf16.mxu0 0
      %780 = vmatpush1.bf16.msra.mxu0 0
      %781 = vmatprep.subr.bf16.mxu0 0
      %782 = vmatpush1.bf16.msra.mxu0 0
      %783 = vmatprep.subr.bf16.mxu0 0
      %784 = vmatpush1.bf16.msra.mxu0 0
      %785 = vmatprep.subr.bf16.mxu0 0
      %786 = vmatpush1.bf16.msra.mxu0 0
      %787 = vmatprep.mubr.bf16.mxu0 0
      %788 = vmatmul.mubr.bf16.gmra.mrb[0].mxu0 %v744
      %v789 = vpop.f32.mrb[0].mxu0
      %v790 = vadd.f32 0.0, %v789
      %v791 = vpop.f32.mrb[0].mxu0
      %v792 = vadd.f32 0.0, %v791
      %v793 = vpop.f32.mrb[0].mxu0
      %v794 = vpop.f32.mrb[0].mxu0
      %795 = vdwg.mxu0
      %796 = vmatprep.subr.bf16.mxu0 0
      %797 = vmatpush1.bf16.msra.mxu0 %v753
      %798 = vmatprep.subr.bf16.mxu0 0
      %799 = vmatpush1.bf16.msra.mxu0 0
      %800 = vmatprep.subr.bf16.mxu0 0
      %801 = vmatpush1.bf16.msra.mxu0 0
      %802 = vmatprep.subr.bf16.mxu0 0
      %803 = vmatpush1.bf16.msra.mxu0 0
      %804 = vmatprep.subr.bf16.mxu0 0
      %805 = vmatpush1.bf16.msra.mxu0 0
      %806 = vmatprep.subr.bf16.mxu0 0
      %807 = vmatpush1.bf16.msra.mxu0 0
      %808 = vmatprep.subr.bf16.mxu0 0
      %809 = vmatpush1.bf16.msra.mxu0 0
      %810 = vmatprep.subr.bf16.mxu0 0
      %811 = vmatpush1.bf16.msra.mxu0 0
      %812 = vmatprep.subr.bf16.mxu0 0
      %813 = vmatpush1.bf16.msra.mxu0 0
      %814 = vmatprep.subr.bf16.mxu0 0
      %815 = vmatpush1.bf16.msra.mxu0 0
      %816 = vmatprep.subr.bf16.mxu0 0
      %817 = vmatpush1.bf16.msra.mxu0 0
      %818 = vmatprep.subr.bf16.mxu0 0
      %819 = vmatpush1.bf16.msra.mxu0 0
      %820 = vmatprep.subr.bf16.mxu0 0
      %821 = vmatpush1.bf16.msra.mxu0 0
      %822 = vmatprep.subr.bf16.mxu0 0
      %823 = vmatpush1.bf16.msra.mxu0 0
      %824 = vmatprep.subr.bf16.mxu0 0
      %825 = vmatpush1.bf16.msra.mxu0 0
      %826 = vmatprep.subr.bf16.mxu0 0
      %827 = vmatpush1.bf16.msra.mxu0 0
      %828 = vmatprep.mubr.bf16.mxu0 0
      %829 = vmatmul.mubr.bf16.gmra.mrb[0].mxu0 %v744
      %v830 = vpop.f32.mrb[0].mxu0
      %v831 = vadd.f32 0.0, %v830
      %v832 = vpop.f32.mrb[0].mxu0
      %v833 = vpop.f32.mrb[0].mxu0
      %v834 = vpop.f32.mrb[0].mxu0
      %835 = vdwg.mxu0
      %v836 = vadd.f32 %v729, %v790
      %v837 = vadd.f32 %v730, %v792
      %v838 = vadd.f32 %v731, %v831
      %s839 = scalar_lea.vmem %s1, 10
      %v840 = vld [vmem:[%s839] sm:$0x3]
      %841 = vrot.lane.b32.xlu0 %v318, 108
      %v842 = vpop.permute.xlu0 %841
      %843 = vrot.lane.b32.xlu0 %v319, 108
      %v844 = vpop.permute.xlu0 %843
      %845 = vrot.lane.b32.xlu0 %v320, 108
      %v846 = vpop.permute.xlu0 %845
      %vm847 = vcmask 883712
      %v848 = vsel %vm847, %v842, %v844
      %v849 = vsel %vm847, %v844, %v846
      %v851 = vsel %vm330, %v840, 0
      %v854 = vsel %vm334, %v848, 0
      %v857 = vsel %vm334, %v849, 0
      %v860 = vsel %vm334, %v846, 0
      %862 = vmatprep.subr.bf16.mxu0 %v857
      %863 = vmatpush1.bf16.msra.mxu0 %v854
      %864 = vmatprep.subr.bf16.mxu0 0
      %865 = vmatpush1.bf16.msra.mxu0 0
      %866 = vmatprep.subr.bf16.mxu0 0
      %867 = vmatpush1.bf16.msra.mxu0 0
      %868 = vmatprep.subr.bf16.mxu0 0
      %869 = vmatpush1.bf16.msra.mxu0 0
      %870 = vmatprep.subr.bf16.mxu0 0
      %871 = vmatpush1.bf16.msra.mxu0 0
      %872 = vmatprep.subr.bf16.mxu0 0
      %873 = vmatpush1.bf16.msra.mxu0 0
      %874 = vmatprep.subr.bf16.mxu0 0
      %875 = vmatpush1.bf16.msra.mxu0 0
      %876 = vmatprep.subr.bf16.mxu0 0
      %877 = vmatpush1.bf16.msra.mxu0 0
      %878 = vmatprep.subr.bf16.mxu0 0
      %879 = vmatpush1.bf16.msra.mxu0 0
      %880 = vmatprep.subr.bf16.mxu0 0
      %881 = vmatpush1.bf16.msra.mxu0 0
      %882 = vmatprep.subr.bf16.mxu0 0
      %883 = vmatpush1.bf16.msra.mxu0 0
      %884 = vmatprep.subr.bf16.mxu0 0
      %885 = vmatpush1.bf16.msra.mxu0 0
      %886 = vmatprep.subr.bf16.mxu0 0
      %887 = vmatpush1.bf16.msra.mxu0 0
      %888 = vmatprep.subr.bf16.mxu0 0
      %889 = vmatpush1.bf16.msra.mxu0 0
      %890 = vmatprep.subr.bf16.mxu0 0
      %891 = vmatpush1.bf16.msra.mxu0 0
      %892 = vmatprep.subr.bf16.mxu0 0
      %893 = vmatpush1.bf16.msra.mxu0 0
      %894 = vmatprep.mubr.bf16.mxu0 0
      %895 = vmatmul.mubr.bf16.gmra.mrb[0].mxu0 %v851
      %v896 = vpop.f32.mrb[0].mxu0
      %v897 = vadd.f32 0.0, %v896
      %v898 = vpop.f32.mrb[0].mxu0
      %v899 = vadd.f32 0.0, %v898
      %v900 = vpop.f32.mrb[0].mxu0
      %v901 = vpop.f32.mrb[0].mxu0
      %902 = vdwg.mxu0
      %903 = vmatprep.subr.bf16.mxu0 0
      %904 = vmatpush1.bf16.msra.mxu0 %v860
      %905 = vmatprep.subr.bf16.mxu0 0
      %906 = vmatpush1.bf16.msra.mxu0 0
      %907 = vmatprep.subr.bf16.mxu0 0
      %908 = vmatpush1.bf16.msra.mxu0 0
      %909 = vmatprep.subr.bf16.mxu0 0
      %910 = vmatpush1.bf16.msra.mxu0 0
      %911 = vmatprep.subr.bf16.mxu0 0
      %912 = vmatpush1.bf16.msra.mxu0 0
      %913 = vmatprep.subr.bf16.mxu0 0
      %914 = vmatpush1.bf16.msra.mxu0 0
      %915 = vmatprep.subr.bf16.mxu0 0
      %916 = vmatpush1.bf16.msra.mxu0 0
      %917 = vmatprep.subr.bf16.mxu0 0
      %918 = vmatpush1.bf16.msra.mxu0 0
      %919 = vmatprep.subr.bf16.mxu0 0
      %920 = vmatpush1.bf16.msra.mxu0 0
      %921 = vmatprep.subr.bf16.mxu0 0
      %922 = vmatpush1.bf16.msra.mxu0 0
      %923 = vmatprep.subr.bf16.mxu0 0
      %924 = vmatpush1.bf16.msra.mxu0 0
      %925 = vmatprep.subr.bf16.mxu0 0
      %926 = vmatpush1.bf16.msra.mxu0 0
      %927 = vmatprep.subr.bf16.mxu0 0
      %928 = vmatpush1.bf16.msra.mxu0 0
      %929 = vmatprep.subr.bf16.mxu0 0
      %930 = vmatpush1.bf16.msra.mxu0 0
      %931 = vmatprep.subr.bf16.mxu0 0
      %932 = vmatpush1.bf16.msra.mxu0 0
      %933 = vmatprep.subr.bf16.mxu0 0
      %934 = vmatpush1.bf16.msra.mxu0 0
      %935 = vmatprep.mubr.bf16.mxu0 0
      %936 = vmatmul.mubr.bf16.gmra.mrb[0].mxu0 %v851
      %v937 = vpop.f32.mrb[0].mxu0
      %v938 = vadd.f32 0.0, %v937
      %v939 = vpop.f32.mrb[0].mxu0
      %v940 = vpop.f32.mrb[0].mxu0
      %v941 = vpop.f32.mrb[0].mxu0
      %942 = vdwg.mxu0
      %v943 = vadd.f32 %v836, %v897
      %v944 = vadd.f32 %v837, %v899
      %v945 = vadd.f32 %v838, %v938
      %s946 = scalar_lea.vmem %s1, 12
      %v947 = vld [vmem:[%s946] sm:$0x3]
      %948 = vrot.lane.b32.xlu0 %v318, 92
      %v949 = vpop.permute.xlu0 %948
      %950 = vrot.lane.b32.xlu0 %v319, 92
      %v951 = vpop.permute.xlu0 %950
      %952 = vrot.lane.b32.xlu0 %v320, 92
      %v953 = vpop.permute.xlu0 %952
      %vm954 = vcmask 752640
      %v955 = vsel %vm954, %v949, %v951
      %v956 = vsel %vm954, %v951, %v953
      %v958 = vsel %vm330, %v947, 0
      %v961 = vsel %vm334, %v955, 0
      %v964 = vsel %vm334, %v956, 0
      %v967 = vsel %vm334, %v953, 0
      %969 = vmatprep.subr.bf16.mxu0 %v964
      %970 = vmatpush1.bf16.msra.mxu0 %v961
      %971 = vmatprep.subr.bf16.mxu0 0
      %972 = vmatpush1.bf16.msra.mxu0 0
      %973 = vmatprep.subr.bf16.mxu0 0
      %974 = vmatpush1.bf16.msra.mxu0 0
      %975 = vmatprep.subr.bf16.mxu0 0
      %976 = vmatpush1.bf16.msra.mxu0 0
      %977 = vmatprep.subr.bf16.mxu0 0
      %978 = vmatpush1.bf16.msra.mxu0 0
      %979 = vmatprep.subr.bf16.mxu0 0
      %980 = vmatpush1.bf16.msra.mxu0 0
      %981 = vmatprep.subr.bf16.mxu0 0
      %982 = vmatpush1.bf16.msra.mxu0 0
      %983 = vmatprep.subr.bf16.mxu0 0
      %984 = vmatpush1.bf16.msra.mxu0 0
      %985 = vmatprep.subr.bf16.mxu0 0
      %986 = vmatpush1.bf16.msra.mxu0 0
      %987 = vmatprep.subr.bf16.mxu0 0
      %988 = vmatpush1.bf16.msra.mxu0 0
      %989 = vmatprep.subr.bf16.mxu0 0
      %990 = vmatpush1.bf16.msra.mxu0 0
      %991 = vmatprep.subr.bf16.mxu0 0
      %992 = vmatpush1.bf16.msra.mxu0 0
      %993 = vmatprep.subr.bf16.mxu0 0
      %994 = vmatpush1.bf16.msra.mxu0 0
      %995 = vmatprep.subr.bf16.mxu0 0
      %996 = vmatpush1.bf16.msra.mxu0 0
      %997 = vmatprep.subr.bf16.mxu0 0
      %998 = vmatpush1.bf16.msra.mxu0 0
      %999 = vmatprep.subr.bf16.mxu0 0
      %1000 = vmatpush1.bf16.msra.mxu0 0
      %1001 = vmatprep.mubr.bf16.mxu0 0
      %1002 = vmatmul.mubr.bf16.gmra.mrb[0].mxu0 %v958
      %v1003 = vpop.f32.mrb[0].mxu0
      %v1004 = vadd.f32 0.0, %v1003
      %v1005 = vpop.f32.mrb[0].mxu0
      %v1006 = vadd.f32 0.0, %v1005
      %v1007 = vpop.f32.mrb[0].mxu0
      %v1008 = vpop.f32.mrb[0].mxu0
      %1009 = vdwg.mxu0
      %1010 = vmatprep.subr.bf16.mxu0 0
      %1011 = vmatpush1.bf16.msra.mxu0 %v967
      %1012 = vmatprep.subr.bf16.mxu0 0
      %1013 = vmatpush1.bf16.msra.mxu0 0
      %1014 = vmatprep.subr.bf16.mxu0 0
      %1015 = vmatpush1.bf16.msra.mxu0 0
      %1016 = vmatprep.subr.bf16.mxu0 0
      %1017 = vmatpush1.bf16.msra.mxu0 0
      %1018 = vmatprep.subr.bf16.mxu0 0
      %1019 = vmatpush1.bf16.msra.mxu0 0
      %1020 = vmatprep.subr.bf16.mxu0 0
      %1021 = vmatpush1.bf16.msra.mxu0 0
      %1022 = vmatprep.subr.bf16.mxu0 0
      %1023 = vmatpush1.bf16.msra.mxu0 0
      %1024 = vmatprep.subr.bf16.mxu0 0
      %1025 = vmatpush1.bf16.msra.mxu0 0
      %1026 = vmatprep.subr.bf16.mxu0 0
      %1027 = vmatpush1.bf16.msra.mxu0 0
      %1028 = vmatprep.subr.bf16.mxu0 0
      %1029 = vmatpush1.bf16.msra.mxu0 0
      %1030 = vmatprep.subr.bf16.mxu0 0
      %1031 = vmatpush1.bf16.msra.mxu0 0
      %1032 = vmatprep.subr.bf16.mxu0 0
      %1033 = vmatpush1.bf16.msra.mxu0 0
      %1034 = vmatprep.subr.bf16.mxu0 0
      %1035 = vmatpush1.bf16.msra.mxu0 0
      %1036 = vmatprep.subr.bf16.mxu0 0
      %1037 = vmatpush1.bf16.msra.mxu0 0
      %1038 = vmatprep.subr.bf16.mxu0 0
      %1039 = vmatpush1.bf16.msra.mxu0 0
      %1040 = vmatprep.subr.bf16.mxu0 0
      %1041 = vmatpush1.bf16.msra.mxu0 0
      %1042 = vmatprep.mubr.bf16.mxu0 0
      %1043 = vmatmul.mubr.bf16.gmra.mrb[0].mxu0 %v958
      %v1044 = vpop.f32.mrb[0].mxu0
      %v1045 = vadd.f32 0.0, %v1044
      %v1046 = vpop.f32.mrb[0].mxu0
      %v1047 = vpop.f32.mrb[0].mxu0
      %v1048 = vpop.f32.mrb[0].mxu0
      %1049 = vdwg.mxu0
      %v1050 = vadd.f32 %v943, %v1004
      %v1051 = vadd.f32 %v944, %v1006
      %v1052 = vadd.f32 %v945, %v1045
      %s1053 = scalar_lea.vmem %s1, 14
      %v1054 = vld [vmem:[%s1053] sm:$0x3]
      %1055 = vrot.lane.b32.xlu0 %v318, 91
      %v1056 = vpop.permute.xlu0 %1055
      %1057 = vrot.lane.b32.xlu0 %v319, 91
      %v1058 = vpop.permute.xlu0 %1057
      %1059 = vrot.lane.b32.xlu0 %v320, 91
      %v1060 = vpop.permute.xlu0 %1059
      %vm1061 = vcmask 744448
      %v1062 = vsel %vm1061, %v1056, %v1058
      %v1063 = vsel %vm1061, %v1058, %v1060
      %v1065 = vsel %vm330, %v1054, 0
      %v1068 = vsel %vm334, %v1062, 0
      %v1071 = vsel %vm334, %v1063, 0
      %v1074 = vsel %vm334, %v1060, 0
      %1076 = vmatprep.subr.bf16.mxu0 %v1071
      %1077 = vmatpush1.bf16.msra.mxu0 %v1068
      %1078 = vmatprep.subr.bf16.mxu0 0
      %1079 = vmatpush1.bf16.msra.mxu0 0
      %1080 = vmatprep.subr.bf16.mxu0 0
      %1081 = vmatpush1.bf16.msra.mxu0 0
      %1082 = vmatprep.subr.bf16.mxu0 0
      %1083 = vmatpush1.bf16.msra.mxu0 0
      %1084 = vmatprep.subr.bf16.mxu0 0
      %1085 = vmatpush1.bf16.msra.mxu0 0
      %1086 = vmatprep.subr.bf16.mxu0 0
      %1087 = vmatpush1.bf16.msra.mxu0 0
      %1088 = vmatprep.subr.bf16.mxu0 0
      %1089 = vmatpush1.bf16.msra.mxu0 0
      %1090 = vmatprep.subr.bf16.mxu0 0
      %1091 = vmatpush1.bf16.msra.mxu0 0
      %1092 = vmatprep.subr.bf16.mxu0 0
      %1093 = vmatpush1.bf16.msra.mxu0 0
      %1094 = vmatprep.subr.bf16.mxu0 0
      %1095 = vmatpush1.bf16.msra.mxu0 0
      %1096 = vmatprep.subr.bf16.mxu0 0
      %1097 = vmatpush1.bf16.msra.mxu0 0
      %1098 = vmatprep.subr.bf16.mxu0 0
      %1099 = vmatpush1.bf16.msra.mxu0 0
      %1100 = vmatprep.subr.bf16.mxu0 0
      %1101 = vmatpush1.bf16.msra.mxu0 0
      %1102 = vmatprep.subr.bf16.mxu0 0
      %1103 = vmatpush1.bf16.msra.mxu0 0
      %1104 = vmatprep.subr.bf16.mxu0 0
      %1105 = vmatpush1.bf16.msra.mxu0 0
      %1106 = vmatprep.subr.bf16.mxu0 0
      %1107 = vmatpush1.bf16.msra.mxu0 0
      %1108 = vmatprep.mubr.bf16.mxu0 0
      %1109 = vmatmul.mubr.bf16.gmra.mrb[0].mxu0 %v1065
      %v1110 = vpop.f32.mrb[0].mxu0
      %v1111 = vadd.f32 0.0, %v1110
      %v1112 = vpop.f32.mrb[0].mxu0
      %v1113 = vadd.f32 0.0, %v1112
      %v1114 = vpop.f32.mrb[0].mxu0
      %v1115 = vpop.f32.mrb[0].mxu0
      %1116 = vdwg.mxu0
      %1117 = vmatprep.subr.bf16.mxu0 0
      %1118 = vmatpush1.bf16.msra.mxu0 %v1074
      %1119 = vmatprep.subr.bf16.mxu0 0
      %1120 = vmatpush1.bf16.msra.mxu0 0
      %1121 = vmatprep.subr.bf16.mxu0 0
      %1122 = vmatpush1.bf16.msra.mxu0 0
      %1123 = vmatprep.subr.bf16.mxu0 0
      %1124 = vmatpush1.bf16.msra.mxu0 0
      %1125 = vmatprep.subr.bf16.mxu0 0
      %1126 = vmatpush1.bf16.msra.mxu0 0
      %1127 = vmatprep.subr.bf16.mxu0 0
      %1128 = vmatpush1.bf16.msra.mxu0 0
      %1129 = vmatprep.subr.bf16.mxu0 0
      %1130 = vmatpush1.bf16.msra.mxu0 0
      %1131 = vmatprep.subr.bf16.mxu0 0
      %1132 = vmatpush1.bf16.msra.mxu0 0
      %1133 = vmatprep.subr.bf16.mxu0 0
      %1134 = vmatpush1.bf16.msra.mxu0 0
      %1135 = vmatprep.subr.bf16.mxu0 0
      %1136 = vmatpush1.bf16.msra.mxu0 0
      %1137 = vmatprep.subr.bf16.mxu0 0
      %1138 = vmatpush1.bf16.msra.mxu0 0
      %1139 = vmatprep.subr.bf16.mxu0 0
      %1140 = vmatpush1.bf16.msra.mxu0 0
      %1141 = vmatprep.subr.bf16.mxu0 0
      %1142 = vmatpush1.bf16.msra.mxu0 0
      %1143 = vmatprep.subr.bf16.mxu0 0
      %1144 = vmatpush1.bf16.msra.mxu0 0
      %1145 = vmatprep.subr.bf16.mxu0 0
      %1146 = vmatpush1.bf16.msra.mxu0 0
      %1147 = vmatprep.subr.bf16.mxu0 0
      %1148 = vmatpush1.bf16.msra.mxu0 0
      %1149 = vmatprep.mubr.bf16.mxu0 0
      %1150 = vmatmul.mubr.bf16.gmra.mrb[0].mxu0 %v1065
      %v1151 = vpop.f32.mrb[0].mxu0
      %v1152 = vadd.f32 0.0, %v1151
      %v1153 = vpop.f32.mrb[0].mxu0
      %v1154 = vpop.f32.mrb[0].mxu0
      %v1155 = vpop.f32.mrb[0].mxu0
      %1156 = vdwg.mxu0
      %v1157 = vadd.f32 %v1050, %v1111
      %v1158 = vadd.f32 %v1051, %v1113
      %v1159 = vadd.f32 %v1052, %v1152
      %s1160 = scalar_lea.vmem %s1, 16
      %v1161 = vld [vmem:[%s1160] sm:$0x3]
      %1162 = vrot.lane.b32.xlu0 %v318, 90
      %v1163 = vpop.permute.xlu0 %1162
      %1164 = vrot.lane.b32.xlu0 %v319, 90
      %v1165 = vpop.permute.xlu0 %1164
      %1166 = vrot.lane.b32.xlu0 %v320, 90
      %v1167 = vpop.permute.xlu0 %1166
      %vm1168 = vcmask 736256
      %v1169 = vsel %vm1168, %v1163, %v1165
      %v1170 = vsel %vm1168, %v1165, %v1167
      %v1172 = vsel %vm330, %v1161, 0
      %v1175 = vsel %vm334, %v1169, 0
      %v1178 = vsel %vm334, %v1170, 0
      %v1181 = vsel %vm334, %v1167, 0
      %1183 = vmatprep.subr.bf16.mxu0 %v1178
      %1184 = vmatpush1.bf16.msra.mxu0 %v1175
      %1185 = vmatprep.subr.bf16.mxu0 0
      %1186 = vmatpush1.bf16.msra.mxu0 0
      %1187 = vmatprep.subr.bf16.mxu0 0
      %1188 = vmatpush1.bf16.msra.mxu0 0
      %1189 = vmatprep.subr.bf16.mxu0 0
      %1190 = vmatpush1.bf16.msra.mxu0 0
      %1191 = vmatprep.subr.bf16.mxu0 0
      %1192 = vmatpush1.bf16.msra.mxu0 0
      %1193 = vmatprep.subr.bf16.mxu0 0
      %1194 = vmatpush1.bf16.msra.mxu0 0
      %1195 = vmatprep.subr.bf16.mxu0 0
      %1196 = vmatpush1.bf16.msra.mxu0 0
      %1197 = vmatprep.subr.bf16.mxu0 0
      %1198 = vmatpush1.bf16.msra.mxu0 0
      %1199 = vmatprep.subr.bf16.mxu0 0
      %1200 = vmatpush1.bf16.msra.mxu0 0
      %1201 = vmatprep.subr.bf16.mxu0 0
      %1202 = vmatpush1.bf16.msra.mxu0 0
      %1203 = vmatprep.subr.bf16.mxu0 0
      %1204 = vmatpush1.bf16.msra.mxu0 0
      %1205 = vmatprep.subr.bf16.mxu0 0
      %1206 = vmatpush1.bf16.msra.mxu0 0
      %1207 = vmatprep.subr.bf16.mxu0 0
      %1208 = vmatpush1.bf16.msra.mxu0 0
      %1209 = vmatprep.subr.bf16.mxu0 0
      %1210 = vmatpush1.bf16.msra.mxu0 0
      %1211 = vmatprep.subr.bf16.mxu0 0
      %1212 = vmatpush1.bf16.msra.mxu0 0
      %1213 = vmatprep.subr.bf16.mxu0 0
      %1214 = vmatpush1.bf16.msra.mxu0 0
      %1215 = vmatprep.mubr.bf16.mxu0 0
      %1216 = vmatmul.mubr.bf16.gmra.mrb[0].mxu0 %v1172
      %v1217 = vpop.f32.mrb[0].mxu0
      %v1218 = vadd.f32 0.0, %v1217
      %v1219 = vpop.f32.mrb[0].mxu0
      %v1220 = vadd.f32 0.0, %v1219
      %v1221 = vpop.f32.mrb[0].mxu0
      %v1222 = vpop.f32.mrb[0].mxu0
      %1223 = vdwg.mxu0
      %1224 = vmatprep.subr.bf16.mxu0 0
      %1225 = vmatpush1.bf16.msra.mxu0 %v1181
      %1226 = vmatprep.subr.bf16.mxu0 0
      %1227 = vmatpush1.bf16.msra.mxu0 0
      %1228 = vmatprep.subr.bf16.mxu0 0
      %1229 = vmatpush1.bf16.msra.mxu0 0
      %1230 = vmatprep.subr.bf16.mxu0 0
      %1231 = vmatpush1.bf16.msra.mxu0 0
      %1232 = vmatprep.subr.bf16.mxu0 0
      %1233 = vmatpush1.bf16.msra.mxu0 0
      %1234 = vmatprep.subr.bf16.mxu0 0
      %1235 = vmatpush1.bf16.msra.mxu0 0
      %1236 = vmatprep.subr.bf16.mxu0 0
      %1237 = vmatpush1.bf16.msra.mxu0 0
      %1238 = vmatprep.subr.bf16.mxu0 0
      %1239 = vmatpush1.bf16.msra.mxu0 0
      %1240 = vmatprep.subr.bf16.mxu0 0
      %1241 = vmatpush1.bf16.msra.mxu0 0
      %1242 = vmatprep.subr.bf16.mxu0 0
      %1243 = vmatpush1.bf16.msra.mxu0 0
      %1244 = vmatprep.subr.bf16.mxu0 0
      %1245 = vmatpush1.bf16.msra.mxu0 0
      %1246 = vmatprep.subr.bf16.mxu0 0
      %1247 = vmatpush1.bf16.msra.mxu0 0
      %1248 = vmatprep.subr.bf16.mxu0 0
      %1249 = vmatpush1.bf16.msra.mxu0 0
      %1250 = vmatprep.subr.bf16.mxu0 0
      %1251 = vmatpush1.bf16.msra.mxu0 0
      %1252 = vmatprep.subr.bf16.mxu0 0
      %1253 = vmatpush1.bf16.msra.mxu0 0
      %1254 = vmatprep.subr.bf16.mxu0 0
      %1255 = vmatpush1.bf16.msra.mxu0 0
      %1256 = vmatprep.mubr.bf16.mxu0 0
      %1257 = vmatmul.mubr.bf16.gmra.mrb[0].mxu0 %v1172
      %v1258 = vpop.f32.mrb[0].mxu0
      %v1259 = vadd.f32 0.0, %v1258
      %v1260 = vpop.f32.mrb[0].mxu0
      %v1261 = vpop.f32.mrb[0].mxu0
      %v1262 = vpop.f32.mrb[0].mxu0
      %1263 = vdwg.mxu0
      %v1264 = vadd.f32 %v1157, %v1218
      %v1265 = vadd.f32 %v1158, %v1220
      %v1266 = vadd.f32 %v1159, %v1259
      %v1268 = vlaneseq
      %v1269 = vshrl.u32 %v1268, 7
      %v1270 = vsub.s32 0, %v1269
      %v1271 = vrot.slane %v307, %v1270
      %v1272 = vlaneseq
      %v1273 = vshrl.u32 %v1272, 7
      %v1274 = vsub.s32 1, %v1273
      %v1275 = vrot.slane %v307, %v1274
      %v1276 = vlaneseq
      %v1277 = vshrl.u32 %v1276, 7
      %v1278 = vsub.s32 2, %v1277
      %v1279 = vrot.slane %v307, %v1278
      %v1283 = vmul.f32 %v1264, %v1271
      %v1284 = vmul.f32 %v1265, %v1275
      %v1285 = vmul.f32 %v1266, %v1279
      %v1286 = vsel %vm334, %v1283, 0.0
      %v1287 = vsel %vm334, %v1284, 0.0
      %v1288 = vadd.f32 %v1286, %v1287
      %vm1289 = vcmask 551936
      %v1290 = vsel %vm1289, %v1285, 0.0
      %v1291 = vadd.f32 %v1288, %v1290
      %1292 = vadd.xlane.f32.xlu0 %v1291
      %v1293 = vpop.xlane.xlu0 %1292
      %v1294 = vmul.f32 %v1283, %v1264
      %v1295 = vmul.f32 %v1284, %v1265
      %v1296 = vmul.f32 %v1285, %v1266
      %v1297 = vsel %vm334, %v1294, 0.0
      %v1298 = vsel %vm334, %v1295, 0.0
      %v1299 = vadd.f32 %v1297, %v1298
      %v1300 = vsel %vm1289, %v1296, 0.0
      %v1301 = vadd.f32 %v1299, %v1300
      %1302 = vadd.xlane.f32.xlu0 %v1301
      %v1303 = vpop.xlane.xlu0 %1302
      %v1304 = vmul.f32 %v1293, 0.00390625
      %v1305 = vmul.f32 %v1303, 0.00390625
      %v1306 = vmul.f32 %v1304, %v1304
      %v1307 = vsub.f32 %v1305, %v1306
      %v1308 = vadd.f32 %v1307, 1e-05
      %v1309 = vrsqrt.pop %v1308
      %v1310 = vld [vmem:[%s2] sm:$0xf]
      %v1311 = vmul.f32 %v1309, %v1310
      %v1312 = vsub.f32 %v1264, %v1304
      %v1313 = vsub.f32 %v1265, %v1304
      %v1314 = vsub.f32 %v1266, %v1304
      %1316 = vset.pattern.permute.xlu0 0
      %1317 = vperm.xlu0 %1316, %v1311
      %v1318 = vpop.permute.xlu0 %1317
      %v1320 = vmul.f32 %v1312, %v1318
      %v1321 = vmul.f32 %v1313, %v1318
      %v1322 = vmul.f32 %v1314, %v1318
      %v1323 = vld [vmem:[%s3] sm:$0xf]
      %1325 = vset.pattern.permute.xlu0 0
      %1326 = vperm.xlu0 %1325, %v1323
      %v1327 = vpop.permute.xlu0 %1326
      %v1329 = vadd.f32 %v1320, %v1327
      %v1330 = vadd.f32 %v1321, %v1327
      %v1331 = vadd.f32 %v1322, %v1327
      %vm1332 = vcmp.ge.f32.partialorder %v1329, 0.0
      %vm1333 = vcmp.ge.f32.partialorder %v1330, 0.0
      %vm1334 = vcmp.ge.f32.partialorder %v1331, 0.0
      %v1335 = vmul.f32 %v1329, 0.01
      %v1336 = vmul.f32 %v1330, 0.01
      %v1337 = vmul.f32 %v1331, 0.01
      %v1338 = vsel %vm1332, %v1329, %v1335
      %v1339 = vsel %vm1333, %v1330, %v1336
      %v1340 = vsel %vm1334, %v1331, %v1337
      %vm1341 = vcmask 1041408
      %vm1342 = vcmask 1043458
      %vm1343 = vmor %vm1342, %vm1341
      %vm1344 = vcmask 865284
      %vm1345 = vmor %vm1344, %vm1343
      %1346 = vst.msk [vmem:[#allocation2] sm:$0x3f] %vm1345, 0
      %v1347 = vmul.f32 %v1338, %v1271
      %v1348 = vmul.f32 %v1339, %v1275
      %v1349 = vmul.f32 %v1340, %v1279
      %v1350 = vpack.c.bf16 %v1347, %v1347
      %v1351 = vpack.c.bf16 %v1348, %v1348
      %v1352 = vpack.c.bf16 %v1349, %v1349
      %v1356 = vcombine.low %v1350, %v1351
      %v1358 = vunpack.c.l.s4 1983009808
      %v1359 = vunpack.c.0.s8 %v1358
      %v1360 = vlaneseq
      %v1361 = vshrl.u32 %v1360, 7
      %v1362 = vsub.s32 %v1359, %v1361
      %v1363 = vrot.slane %v1356, %v1362
      %v1365 = vunpack.c.l.s4 1983009808
      %v1366 = vunpack.c.0.s8 %v1365
      %v1367 = vlaneseq
      %v1368 = vshrl.u32 %v1367, 7
      %v1369 = vsub.s32 %v1366, %v1368
      %v1370 = vrot.slane %v1352, %v1369
      %v1371 = vcombine.low %v1363, %v1370
      %1372 = vrot.lane.b32.xlu0 %v1371, 19
      %v1373 = vpop.permute.xlu0 %1372
      %v1374 = vrot.slane %v1373, 6
      %vm1375 = vcmask 154624
      %v1376 = vsel %vm1375, %v1374, %v1373
      %vm1378 = vcmask 1041560
      %vm1379 = vmor %vm1342, %vm1378
      %vm1380 = vcmask 709636
      %vm1381 = vmor %vm1380, %vm1379
      %1382 = vst.msk [vmem:[#allocation2] sm:$0x3f] %vm1381, %v1376
      %v1383 = vld [vmem:[#allocation2] sm:$0x3f]
      %v1384 = vld [vmem:[%s4] sm:$0x3]
      %s1385 = scalar_lea.vmem %s4, 2
      %v1386 = vld [vmem:[%s1385] sm:$0x3]
      %v1388 = vcombine.high %v1383, %v1383
      %v1390 = vunpack.c.l.s4 1983009808
      %v1391 = vunpack.c.0.s8 %v1390
      %v1392 = vlaneseq
      %v1393 = vshrl.u32 %v1392, 7
      %v1394 = vsub.s32 %v1391, %v1393
      %v1395 = vrot.slane %v1383, %v1394
      %v1397 = vunpack.c.l.s4 1983009808
      %v1398 = vunpack.c.0.s8 %v1397
      %v1399 = vlaneseq
      %v1400 = vshrl.u32 %v1399, 7
      %v1401 = vsub.s32 %v1398, %v1400
      %v1402 = vrot.slane %v1388, %v1401
      %v1403 = vcombine.high %v1395, %v1395
      %1404 = vrot.lane.b32.xlu0 %v1395, 127
      %v1405 = vpop.permute.xlu0 %1404
      %1406 = vrot.lane.b32.xlu0 %v1403, 127
      %v1407 = vpop.permute.xlu0 %1406
      %1408 = vrot.lane.b32.xlu0 %v1402, 127
      %v1409 = vpop.permute.xlu0 %1408
      %v1410 = vsel %vm327, %v1405, %v1407
      %v1411 = vsel %vm327, %v1407, %v1409
      %vm1412 = vcmask 31744
      %v1414 = vsel %vm1412, %v1386, 0
      %v1417 = vsel %vm1341, %v1410, 0
      %v1420 = vsel %vm1341, %v1411, 0
      %v1423 = vsel %vm1341, %v1409, 0
      %1425 = vmatprep.subr.bf16.mxu0 %v1420
      %1426 = vmatpush1.bf16.msra.mxu0 %v1417
      %1427 = vmatprep.subr.bf16.mxu0 0
      %1428 = vmatpush1.bf16.msra.mxu0 0
      %1429 = vmatprep.subr.bf16.mxu0 0
      %1430 = vmatpush1.bf16.msra.mxu0 0
      %1431 = vmatprep.subr.bf16.mxu0 0
      %1432 = vmatpush1.bf16.msra.mxu0 0
      %1433 = vmatprep.subr.bf16.mxu0 0
      %1434 = vmatpush1.bf16.msra.mxu0 0
      %1435 = vmatprep.subr.bf16.mxu0 0
      %1436 = vmatpush1.bf16.msra.mxu0 0
      %1437 = vmatprep.subr.bf16.mxu0 0
      %1438 = vmatpush1.bf16.msra.mxu0 0
      %1439 = vmatprep.subr.bf16.mxu0 0
      %1440 = vmatpush1.bf16.msra.mxu0 0
      %1441 = vmatprep.subr.bf16.mxu0 0
      %1442 = vmatpush1.bf16.msra.mxu0 0
      %1443 = vmatprep.subr.bf16.mxu0 0
      %1444 = vmatpush1.bf16.msra.mxu0 0
      %1445 = vmatprep.subr.bf16.mxu0 0
      %1446 = vmatpush1.bf16.msra.mxu0 0
      %1447 = vmatprep.subr.bf16.mxu0 0
      %1448 = vmatpush1.bf16.msra.mxu0 0
      %1449 = vmatprep.subr.bf16.mxu0 0
      %1450 = vmatpush1.bf16.msra.mxu0 0
      %1451 = vmatprep.subr.bf16.mxu0 0
      %1452 = vmatpush1.bf16.msra.mxu0 0
      %1453 = vmatprep.subr.bf16.mxu0 0
      %1454 = vmatpush1.bf16.msra.mxu0 0
      %1455 = vmatprep.subr.bf16.mxu0 0
      %1456 = vmatpush1.bf16.msra.mxu0 0
      %1457 = vmatprep.mubr.bf16.mxu0 0
      %1458 = vmatmul.mubr.bf16.gmra.mrb[0].mxu0 %v1414
      %v1459 = vpop.f32.mrb[0].mxu0
      %v1460 = vadd.f32 0.0, %v1459
      %v1461 = vpop.f32.mrb[0].mxu0
      %v1462 = vadd.f32 0.0, %v1461
      %v1463 = vpop.f32.mrb[0].mxu0
      %v1464 = vpop.f32.mrb[0].mxu0
      %1465 = vdwg.mxu0
      %1466 = vmatprep.subr.bf16.mxu0 0
      %1467 = vmatpush1.bf16.msra.mxu0 %v1423
      %1468 = vmatprep.subr.bf16.mxu0 0
      %1469 = vmatpush1.bf16.msra.mxu0 0
      %1470 = vmatprep.subr.bf16.mxu0 0
      %1471 = vmatpush1.bf16.msra.mxu0 0
      %1472 = vmatprep.subr.bf16.mxu0 0
      %1473 = vmatpush1.bf16.msra.mxu0 0
      %1474 = vmatprep.subr.bf16.mxu0 0
      %1475 = vmatpush1.bf16.msra.mxu0 0
      %1476 = vmatprep.subr.bf16.mxu0 0
      %1477 = vmatpush1.bf16.msra.mxu0 0
      %1478 = vmatprep.subr.bf16.mxu0 0
      %1479 = vmatpush1.bf16.msra.mxu0 0
      %1480 = vmatprep.subr.bf16.mxu0 0
      %1481 = vmatpush1.bf16.msra.mxu0 0
      %1482 = vmatprep.subr.bf16.mxu0 0
      %1483 = vmatpush1.bf16.msra.mxu0 0
      %1484 = vmatprep.subr.bf16.mxu0 0
      %1485 = vmatpush1.bf16.msra.mxu0 0
      %1486 = vmatprep.subr.bf16.mxu0 0
      %1487 = vmatpush1.bf16.msra.mxu0 0
      %1488 = vmatprep.subr.bf16.mxu0 0
      %1489 = vmatpush1.bf16.msra.mxu0 0
      %1490 = vmatprep.subr.bf16.mxu0 0
      %1491 = vmatpush1.bf16.msra.mxu0 0
      %1492 = vmatprep.subr.bf16.mxu0 0
      %1493 = vmatpush1.bf16.msra.mxu0 0
      %1494 = vmatprep.subr.bf16.mxu0 0
      %1495 = vmatpush1.bf16.msra.mxu0 0
      %1496 = vmatprep.subr.bf16.mxu0 0
      %1497 = vmatpush1.bf16.msra.mxu0 0
      %1498 = vmatprep.mubr.bf16.mxu0 0
      %1499 = vmatmul.mubr.bf16.gmra.mrb[0].mxu0 %v1414
      %v1500 = vpop.f32.mrb[0].mxu0
      %v1501 = vadd.f32 0.0, %v1500
      %v1502 = vpop.f32.mrb[0].mxu0
      %v1503 = vpop.f32.mrb[0].mxu0
      %v1504 = vpop.f32.mrb[0].mxu0
      %1505 = vdwg.mxu0
      %v1507 = vsel %vm1412, %v1384, 0
      %v1510 = vsel %vm1341, %v1395, 0
      %v1513 = vsel %vm1341, %v1403, 0
      %v1516 = vsel %vm1341, %v1402, 0
      %1518 = vmatprep.subr.bf16.mxu0 %v1513
      %1519 = vmatpush1.bf16.msra.mxu0 %v1510
      %1520 = vmatprep.subr.bf16.mxu0 0
      %1521 = vmatpush1.bf16.msra.mxu0 0
      %1522 = vmatprep.subr.bf16.mxu0 0
      %1523 = vmatpush1.bf16.msra.mxu0 0
      %1524 = vmatprep.subr.bf16.mxu0 0
      %1525 = vmatpush1.bf16.msra.mxu0 0
      %1526 = vmatprep.subr.bf16.mxu0 0
      %1527 = vmatpush1.bf16.msra.mxu0 0
      %1528 = vmatprep.subr.bf16.mxu0 0
      %1529 = vmatpush1.bf16.msra.mxu0 0
      %1530 = vmatprep.subr.bf16.mxu0 0
      %1531 = vmatpush1.bf16.msra.mxu0 0
      %1532 = vmatprep.subr.bf16.mxu0 0
      %1533 = vmatpush1.bf16.msra.mxu0 0
      %1534 = vmatprep.subr.bf16.mxu0 0
      %1535 = vmatpush1.bf16.msra.mxu0 0
      %1536 = vmatprep.subr.bf16.mxu0 0
      %1537 = vmatpush1.bf16.msra.mxu0 0
      %1538 = vmatprep.subr.bf16.mxu0 0
      %1539 = vmatpush1.bf16.msra.mxu0 0
      %1540 = vmatprep.subr.bf16.mxu0 0
      %1541 = vmatpush1.bf16.msra.mxu0 0
      %1542 = vmatprep.subr.bf16.mxu0 0
      %1543 = vmatpush1.bf16.msra.mxu0 0
      %1544 = vmatprep.subr.bf16.mxu0 0
      %1545 = vmatpush1.bf16.msra.mxu0 0
      %1546 = vmatprep.subr.bf16.mxu0 0
      %1547 = vmatpush1.bf16.msra.mxu0 0
      %1548 = vmatprep.subr.bf16.mxu0 0
      %1549 = vmatpush1.bf16.msra.mxu0 0
      %1550 = vmatprep.mubr.bf16.mxu0 0
      %1551 = vmatmul.mubr.bf16.gmra.mrb[0].mxu0 %v1507
      %v1552 = vpop.f32.mrb[0].mxu0
      %v1553 = vadd.f32 %v1460, %v1552
      %v1554 = vpop.f32.mrb[0].mxu0
      %v1555 = vadd.f32 %v1462, %v1554
      %v1556 = vpop.f32.mrb[0].mxu0
      %v1557 = vpop.f32.mrb[0].mxu0
      %1558 = vdwg.mxu0
      %1559 = vmatprep.subr.bf16.mxu0 0
      %1560 = vmatpush1.bf16.msra.mxu0 %v1516
      %1561 = vmatprep.subr.bf16.mxu0 0
      %1562 = vmatpush1.bf16.msra.mxu0 0
      %1563 = vmatprep.subr.bf16.mxu0 0
      %1564 = vmatpush1.bf16.msra.mxu0 0
      %1565 = vmatprep.subr.bf16.mxu0 0
      %1566 = vmatpush1.bf16.msra.mxu0 0
      %1567 = vmatprep.subr.bf16.mxu0 0
      %1568 = vmatpush1.bf16.msra.mxu0 0
      %1569 = vmatprep.subr.bf16.mxu0 0
      %1570 = vmatpush1.bf16.msra.mxu0 0
      %1571 = vmatprep.subr.bf16.mxu0 0
      %1572 = vmatpush1.bf16.msra.mxu0 0
      %1573 = vmatprep.subr.bf16.mxu0 0
      %1574 = vmatpush1.bf16.msra.mxu0 0
      %1575 = vmatprep.subr.bf16.mxu0 0
      %1576 = vmatpush1.bf16.msra.mxu0 0
      %1577 = vmatprep.subr.bf16.mxu0 0
      %1578 = vmatpush1.bf16.msra.mxu0 0
      %1579 = vmatprep.subr.bf16.mxu0 0
      %1580 = vmatpush1.bf16.msra.mxu0 0
      %1581 = vmatprep.subr.bf16.mxu0 0
      %1582 = vmatpush1.bf16.msra.mxu0 0
      %1583 = vmatprep.subr.bf16.mxu0 0
      %1584 = vmatpush1.bf16.msra.mxu0 0
      %1585 = vmatprep.subr.bf16.mxu0 0
      %1586 = vmatpush1.bf16.msra.mxu0 0
      %1587 = vmatprep.subr.bf16.mxu0 0
      %1588 = vmatpush1.bf16.msra.mxu0 0
      %1589 = vmatprep.subr.bf16.mxu0 0
      %1590 = vmatpush1.bf16.msra.mxu0 0
      %1591 = vmatprep.mubr.bf16.mxu0 0
      %1592 = vmatmul.mubr.bf16.gmra.mrb[0].mxu0 %v1507
      %v1593 = vpop.f32.mrb[0].mxu0
      %v1594 = vadd.f32 %v1501, %v1593
      %v1595 = vpop.f32.mrb[0].mxu0
      %v1596 = vpop.f32.mrb[0].mxu0
      %v1597 = vpop.f32.mrb[0].mxu0
      %1598 = vdwg.mxu0
      %s1599 = scalar_lea.vmem %s4, 4
      %v1600 = vld [vmem:[%s1599] sm:$0x3]
      %1601 = vrot.lane.b32.xlu0 %v1395, 126
      %v1602 = vpop.permute.xlu0 %1601
      %1603 = vrot.lane.b32.xlu0 %v1403, 126
      %v1604 = vpop.permute.xlu0 %1603
      %1605 = vrot.lane.b32.xlu0 %v1402, 126
      %v1606 = vpop.permute.xlu0 %1605
      %v1607 = vsel %vm526, %v1602, %v1604
      %v1608 = vsel %vm526, %v1604, %v1606
      %v1610 = vsel %vm1412, %v1600, 0
      %v1613 = vsel %vm1341, %v1607, 0
      %v1616 = vsel %vm1341, %v1608, 0
      %v1619 = vsel %vm1341, %v1606, 0
      %1621 = vmatprep.subr.bf16.mxu0 %v1616
      %1622 = vmatpush1.bf16.msra.mxu0 %v1613
      %1623 = vmatprep.subr.bf16.mxu0 0
      %1624 = vmatpush1.bf16.msra.mxu0 0
      %1625 = vmatprep.subr.bf16.mxu0 0
      %1626 = vmatpush1.bf16.msra.mxu0 0
      %1627 = vmatprep.subr.bf16.mxu0 0
      %1628 = vmatpush1.bf16.msra.mxu0 0
      %1629 = vmatprep.subr.bf16.mxu0 0
      %1630 = vmatpush1.bf16.msra.mxu0 0
      %1631 = vmatprep.subr.bf16.mxu0 0
      %1632 = vmatpush1.bf16.msra.mxu0 0
      %1633 = vmatprep.subr.bf16.mxu0 0
      %1634 = vmatpush1.bf16.msra.mxu0 0
      %1635 = vmatprep.subr.bf16.mxu0 0
      %1636 = vmatpush1.bf16.msra.mxu0 0
      %1637 = vmatprep.subr.bf16.mxu0 0
      %1638 = vmatpush1.bf16.msra.mxu0 0
      %1639 = vmatprep.subr.bf16.mxu0 0
      %1640 = vmatpush1.bf16.msra.mxu0 0
      %1641 = vmatprep.subr.bf16.mxu0 0
      %1642 = vmatpush1.bf16.msra.mxu0 0
      %1643 = vmatprep.subr.bf16.mxu0 0
      %1644 = vmatpush1.bf16.msra.mxu0 0
      %1645 = vmatprep.subr.bf16.mxu0 0
      %1646 = vmatpush1.bf16.msra.mxu0 0
      %1647 = vmatprep.subr.bf16.mxu0 0
      %1648 = vmatpush1.bf16.msra.mxu0 0
      %1649 = vmatprep.subr.bf16.mxu0 0
      %1650 = vmatpush1.bf16.msra.mxu0 0
      %1651 = vmatprep.subr.bf16.mxu0 0
      %1652 = vmatpush1.bf16.msra.mxu0 0
      %1653 = vmatprep.mubr.bf16.mxu0 0
      %1654 = vmatmul.mubr.bf16.gmra.mrb[0].mxu0 %v1610
      %v1655 = vpop.f32.mrb[0].mxu0
      %v1656 = vadd.f32 0.0, %v1655
      %v1657 = vpop.f32.mrb[0].mxu0
      %v1658 = vadd.f32 0.0, %v1657
      %v1659 = vpop.f32.mrb[0].mxu0
      %v1660 = vpop.f32.mrb[0].mxu0
      %1661 = vdwg.mxu0
      %1662 = vmatprep.subr.bf16.mxu0 0
      %1663 = vmatpush1.bf16.msra.mxu0 %v1619
      %1664 = vmatprep.subr.bf16.mxu0 0
      %1665 = vmatpush1.bf16.msra.mxu0 0
      %1666 = vmatprep.subr.bf16.mxu0 0
      %1667 = vmatpush1.bf16.msra.mxu0 0
      %1668 = vmatprep.subr.bf16.mxu0 0
      %1669 = vmatpush1.bf16.msra.mxu0 0
      %1670 = vmatprep.subr.bf16.mxu0 0
      %1671 = vmatpush1.bf16.msra.mxu0 0
      %1672 = vmatprep.subr.bf16.mxu0 0
      %1673 = vmatpush1.bf16.msra.mxu0 0
      %1674 = vmatprep.subr.bf16.mxu0 0
      %1675 = vmatpush1.bf16.msra.mxu0 0
      %1676 = vmatprep.subr.bf16.mxu0 0
      %1677 = vmatpush1.bf16.msra.mxu0 0
      %1678 = vmatprep.subr.bf16.mxu0 0
      %1679 = vmatpush1.bf16.msra.mxu0 0
      %1680 = vmatprep.subr.bf16.mxu0 0
      %1681 = vmatpush1.bf16.msra.mxu0 0
      %1682 = vmatprep.subr.bf16.mxu0 0
      %1683 = vmatpush1.bf16.msra.mxu0 0
      %1684 = vmatprep.subr.bf16.mxu0 0
      %1685 = vmatpush1.bf16.msra.mxu0 0
      %1686 = vmatprep.subr.bf16.mxu0 0
      %1687 = vmatpush1.bf16.msra.mxu0 0
      %1688 = vmatprep.subr.bf16.mxu0 0
      %1689 = vmatpush1.bf16.msra.mxu0 0
      %1690 = vmatprep.subr.bf16.mxu0 0
      %1691 = vmatpush1.bf16.msra.mxu0 0
      %1692 = vmatprep.subr.bf16.mxu0 0
      %1693 = vmatpush1.bf16.msra.mxu0 0
      %1694 = vmatprep.mubr.bf16.mxu0 0
      %1695 = vmatmul.mubr.bf16.gmra.mrb[0].mxu0 %v1610
      %v1696 = vpop.f32.mrb[0].mxu0
      %v1697 = vadd.f32 0.0, %v1696
      %v1698 = vpop.f32.mrb[0].mxu0
      %v1699 = vpop.f32.mrb[0].mxu0
      %v1700 = vpop.f32.mrb[0].mxu0
      %1701 = vdwg.mxu0
      %v1702 = vadd.f32 %v1553, %v1656
      %v1703 = vadd.f32 %v1555, %v1658
      %v1704 = vadd.f32 %v1594, %v1697
      %s1705 = scalar_lea.vmem %s4, 6
      %v1706 = vld [vmem:[%s1705] sm:$0x3]
      %1707 = vrot.lane.b32.xlu0 %v1395, 110
      %v1708 = vpop.permute.xlu0 %1707
      %1709 = vrot.lane.b32.xlu0 %v1403, 110
      %v1710 = vpop.permute.xlu0 %1709
      %1711 = vrot.lane.b32.xlu0 %v1402, 110
      %v1712 = vpop.permute.xlu0 %1711
      %v1713 = vsel %vm633, %v1708, %v1710
      %v1714 = vsel %vm633, %v1710, %v1712
      %v1716 = vsel %vm1412, %v1706, 0
      %v1719 = vsel %vm1341, %v1713, 0
      %v1722 = vsel %vm1341, %v1714, 0
      %v1725 = vsel %vm1341, %v1712, 0
      %1727 = vmatprep.subr.bf16.mxu0 %v1722
      %1728 = vmatpush1.bf16.msra.mxu0 %v1719
      %1729 = vmatprep.subr.bf16.mxu0 0
      %1730 = vmatpush1.bf16.msra.mxu0 0
      %1731 = vmatprep.subr.bf16.mxu0 0
      %1732 = vmatpush1.bf16.msra.mxu0 0
      %1733 = vmatprep.subr.bf16.mxu0 0
      %1734 = vmatpush1.bf16.msra.mxu0 0
      %1735 = vmatprep.subr.bf16.mxu0 0
      %1736 = vmatpush1.bf16.msra.mxu0 0
      %1737 = vmatprep.subr.bf16.mxu0 0
      %1738 = vmatpush1.bf16.msra.mxu0 0
      %1739 = vmatprep.subr.bf16.mxu0 0
      %1740 = vmatpush1.bf16.msra.mxu0 0
      %1741 = vmatprep.subr.bf16.mxu0 0
      %1742 = vmatpush1.bf16.msra.mxu0 0
      %1743 = vmatprep.subr.bf16.mxu0 0
      %1744 = vmatpush1.bf16.msra.mxu0 0
      %1745 = vmatprep.subr.bf16.mxu0 0
      %1746 = vmatpush1.bf16.msra.mxu0 0
      %1747 = vmatprep.subr.bf16.mxu0 0
      %1748 = vmatpush1.bf16.msra.mxu0 0
      %1749 = vmatprep.subr.bf16.mxu0 0
      %1750 = vmatpush1.bf16.msra.mxu0 0
      %1751 = vmatprep.subr.bf16.mxu0 0
      %1752 = vmatpush1.bf16.msra.mxu0 0
      %1753 = vmatprep.subr.bf16.mxu0 0
      %1754 = vmatpush1.bf16.msra.mxu0 0
      %1755 = vmatprep.subr.bf16.mxu0 0
      %1756 = vmatpush1.bf16.msra.mxu0 0
      %1757 = vmatprep.subr.bf16.mxu0 0
      %1758 = vmatpush1.bf16.msra.mxu0 0
      %1759 = vmatprep.mubr.bf16.mxu0 0
      %1760 = vmatmul.mubr.bf16.gmra.mrb[0].mxu0 %v1716
      %v1761 = vpop.f32.mrb[0].mxu0
      %v1762 = vadd.f32 0.0, %v1761
      %v1763 = vpop.f32.mrb[0].mxu0
      %v1764 = vadd.f32 0.0, %v1763
      %v1765 = vpop.f32.mrb[0].mxu0
      %v1766 = vpop.f32.mrb[0].mxu0
      %1767 = vdwg.mxu0
      %1768 = vmatprep.subr.bf16.mxu0 0
      %1769 = vmatpush1.bf16.msra.mxu0 %v1725
      %1770 = vmatprep.subr.bf16.mxu0 0
      %1771 = vmatpush1.bf16.msra.mxu0 0
      %1772 = vmatprep.subr.bf16.mxu0 0
      %1773 = vmatpush1.bf16.msra.mxu0 0
      %1774 = vmatprep.subr.bf16.mxu0 0
      %1775 = vmatpush1.bf16.msra.mxu0 0
      %1776 = vmatprep.subr.bf16.mxu0 0
      %1777 = vmatpush1.bf16.msra.mxu0 0
      %1778 = vmatprep.subr.bf16.mxu0 0
      %1779 = vmatpush1.bf16.msra.mxu0 0
      %1780 = vmatprep.subr.bf16.mxu0 0
      %1781 = vmatpush1.bf16.msra.mxu0 0
      %1782 = vmatprep.subr.bf16.mxu0 0
      %1783 = vmatpush1.bf16.msra.mxu0 0
      %1784 = vmatprep.subr.bf16.mxu0 0
      %1785 = vmatpush1.bf16.msra.mxu0 0
      %1786 = vmatprep.subr.bf16.mxu0 0
      %1787 = vmatpush1.bf16.msra.mxu0 0
      %1788 = vmatprep.subr.bf16.mxu0 0
      %1789 = vmatpush1.bf16.msra.mxu0 0
      %1790 = vmatprep.subr.bf16.mxu0 0
      %1791 = vmatpush1.bf16.msra.mxu0 0
      %1792 = vmatprep.subr.bf16.mxu0 0
      %1793 = vmatpush1.bf16.msra.mxu0 0
      %1794 = vmatprep.subr.bf16.mxu0 0
      %1795 = vmatpush1.bf16.msra.mxu0 0
      %1796 = vmatprep.subr.bf16.mxu0 0
      %1797 = vmatpush1.bf16.msra.mxu0 0
      %1798 = vmatprep.subr.bf16.mxu0 0
      %1799 = vmatpush1.bf16.msra.mxu0 0
      %1800 = vmatprep.mubr.bf16.mxu0 0
      %1801 = vmatmul.mubr.bf16.gmra.mrb[0].mxu0 %v1716
      %v1802 = vpop.f32.mrb[0].mxu0
      %v1803 = vadd.f32 0.0, %v1802
      %v1804 = vpop.f32.mrb[0].mxu0
      %v1805 = vpop.f32.mrb[0].mxu0
      %v1806 = vpop.f32.mrb[0].mxu0
      %1807 = vdwg.mxu0
      %v1808 = vadd.f32 %v1702, %v1762
      %v1809 = vadd.f32 %v1703, %v1764
      %v1810 = vadd.f32 %v1704, %v1803
      %s1811 = scalar_lea.vmem %s4, 8
      %v1812 = vld [vmem:[%s1811] sm:$0x3]
      %1813 = vrot.lane.b32.xlu0 %v1395, 109
      %v1814 = vpop.permute.xlu0 %1813
      %1815 = vrot.lane.b32.xlu0 %v1403, 109
      %v1816 = vpop.permute.xlu0 %1815
      %1817 = vrot.lane.b32.xlu0 %v1402, 109
      %v1818 = vpop.permute.xlu0 %1817
      %v1819 = vsel %vm740, %v1814, %v1816
      %v1820 = vsel %vm740, %v1816, %v1818
      %v1822 = vsel %vm1412, %v1812, 0
      %v1825 = vsel %vm1341, %v1819, 0
      %v1828 = vsel %vm1341, %v1820, 0
      %v1831 = vsel %vm1341, %v1818, 0
      %1833 = vmatprep.subr.bf16.mxu0 %v1828
      %1834 = vmatpush1.bf16.msra.mxu0 %v1825
      %1835 = vmatprep.subr.bf16.mxu0 0
      %1836 = vmatpush1.bf16.msra.mxu0 0
      %1837 = vmatprep.subr.bf16.mxu0 0
      %1838 = vmatpush1.bf16.msra.mxu0 0
      %1839 = vmatprep.subr.bf16.mxu0 0
      %1840 = vmatpush1.bf16.msra.mxu0 0
      %1841 = vmatprep.subr.bf16.mxu0 0
      %1842 = vmatpush1.bf16.msra.mxu0 0
      %1843 = vmatprep.subr.bf16.mxu0 0
      %1844 = vmatpush1.bf16.msra.mxu0 0
      %1845 = vmatprep.subr.bf16.mxu0 0
      %1846 = vmatpush1.bf16.msra.mxu0 0
      %1847 = vmatprep.subr.bf16.mxu0 0
      %1848 = vmatpush1.bf16.msra.mxu0 0
      %1849 = vmatprep.subr.bf16.mxu0 0
      %1850 = vmatpush1.bf16.msra.mxu0 0
      %1851 = vmatprep.subr.bf16.mxu0 0
      %1852 = vmatpush1.bf16.msra.mxu0 0
      %1853 = vmatprep.subr.bf16.mxu0 0
      %1854 = vmatpush1.bf16.msra.mxu0 0
      %1855 = vmatprep.subr.bf16.mxu0 0
      %1856 = vmatpush1.bf16.msra.mxu0 0
      %1857 = vmatprep.subr.bf16.mxu0 0
      %1858 = vmatpush1.bf16.msra.mxu0 0
      %1859 = vmatprep.subr.bf16.mxu0 0
      %1860 = vmatpush1.bf16.msra.mxu0 0
      %1861 = vmatprep.subr.bf16.mxu0 0
      %1862 = vmatpush1.bf16.msra.mxu0 0
      %1863 = vmatprep.subr.bf16.mxu0 0
      %1864 = vmatpush1.bf16.msra.mxu0 0
      %1865 = vmatprep.mubr.bf16.mxu0 0
      %1866 = vmatmul.mubr.bf16.gmra.mrb[0].mxu0 %v1822
      %v1867 = vpop.f32.mrb[0].mxu0
      %v1868 = vadd.f32 0.0, %v1867
      %v1869 = vpop.f32.mrb[0].mxu0
      %v1870 = vadd.f32 0.0, %v1869
      %v1871 = vpop.f32.mrb[0].mxu0
      %v1872 = vpop.f32.mrb[0].mxu0
      %1873 = vdwg.mxu0
      %1874 = vmatprep.subr.bf16.mxu0 0
      %1875 = vmatpush1.bf16.msra.mxu0 %v1831
      %1876 = vmatprep.subr.bf16.mxu0 0
      %1877 = vmatpush1.bf16.msra.mxu0 0
      %1878 = vmatprep.subr.bf16.mxu0 0
      %1879 = vmatpush1.bf16.msra.mxu0 0
      %1880 = vmatprep.subr.bf16.mxu0 0
      %1881 = vmatpush1.bf16.msra.mxu0 0
      %1882 = vmatprep.subr.bf16.mxu0 0
      %1883 = vmatpush1.bf16.msra.mxu0 0
      %1884 = vmatprep.subr.bf16.mxu0 0
      %1885 = vmatpush1.bf16.msra.mxu0 0
      %1886 = vmatprep.subr.bf16.mxu0 0
      %1887 = vmatpush1.bf16.msra.mxu0 0
      %1888 = vmatprep.subr.bf16.mxu0 0
      %1889 = vmatpush1.bf16.msra.mxu0 0
      %1890 = vmatprep.subr.bf16.mxu0 0
      %1891 = vmatpush1.bf16.msra.mxu0 0
      %1892 = vmatprep.subr.bf16.mxu0 0
      %1893 = vmatpush1.bf16.msra.mxu0 0
      %1894 = vmatprep.subr.bf16.mxu0 0
      %1895 = vmatpush1.bf16.msra.mxu0 0
      %1896 = vmatprep.subr.bf16.mxu0 0
      %1897 = vmatpush1.bf16.msra.mxu0 0
      %1898 = vmatprep.subr.bf16.mxu0 0
      %1899 = vmatpush1.bf16.msra.mxu0 0
      %1900 = vmatprep.subr.bf16.mxu0 0
      %1901 = vmatpush1.bf16.msra.mxu0 0
      %1902 = vmatprep.subr.bf16.mxu0 0
      %1903 = vmatpush1.bf16.msra.mxu0 0
      %1904 = vmatprep.subr.bf16.mxu0 0
      %1905 = vmatpush1.bf16.msra.mxu0 0
      %1906 = vmatprep.mubr.bf16.mxu0 0
      %1907 = vmatmul.mubr.bf16.gmra.mrb[0].mxu0 %v1822
      %v1908 = vpop.f32.mrb[0].mxu0
      %v1909 = vadd.f32 0.0, %v1908
      %v1910 = vpop.f32.mrb[0].mxu0
      %v1911 = vpop.f32.mrb[0].mxu0
      %v1912 = vpop.f32.mrb[0].mxu0
      %1913 = vdwg.mxu0
      %v1914 = vadd.f32 %v1808, %v1868
      %v1915 = vadd.f32 %v1809, %v1870
      %v1916 = vadd.f32 %v1810, %v1909
      %s1917 = scalar_lea.vmem %s4, 10
      %v1918 = vld [vmem:[%s1917] sm:$0x3]
      %1919 = vrot.lane.b32.xlu0 %v1395, 108
      %v1920 = vpop.permute.xlu0 %1919
      %1921 = vrot.lane.b32.xlu0 %v1403, 108
      %v1922 = vpop.permute.xlu0 %1921
      %1923 = vrot.lane.b32.xlu0 %v1402, 108
      %v1924 = vpop.permute.xlu0 %1923
      %v1925 = vsel %vm847, %v1920, %v1922
      %v1926 = vsel %vm847, %v1922, %v1924
      %v1928 = vsel %vm1412, %v1918, 0
      %v1931 = vsel %vm1341, %v1925, 0
      %v1934 = vsel %vm1341, %v1926, 0
      %v1937 = vsel %vm1341, %v1924, 0
      %1939 = vmatprep.subr.bf16.mxu0 %v1934
      %1940 = vmatpush1.bf16.msra.mxu0 %v1931
      %1941 = vmatprep.subr.bf16.mxu0 0
      %1942 = vmatpush1.bf16.msra.mxu0 0
      %1943 = vmatprep.subr.bf16.mxu0 0
      %1944 = vmatpush1.bf16.msra.mxu0 0
      %1945 = vmatprep.subr.bf16.mxu0 0
      %1946 = vmatpush1.bf16.msra.mxu0 0
      %1947 = vmatprep.subr.bf16.mxu0 0
      %1948 = vmatpush1.bf16.msra.mxu0 0
      %1949 = vmatprep.subr.bf16.mxu0 0
      %1950 = vmatpush1.bf16.msra.mxu0 0
      %1951 = vmatprep.subr.bf16.mxu0 0
      %1952 = vmatpush1.bf16.msra.mxu0 0
      %1953 = vmatprep.subr.bf16.mxu0 0
      %1954 = vmatpush1.bf16.msra.mxu0 0
      %1955 = vmatprep.subr.bf16.mxu0 0
      %1956 = vmatpush1.bf16.msra.mxu0 0
      %1957 = vmatprep.subr.bf16.mxu0 0
      %1958 = vmatpush1.bf16.msra.mxu0 0
      %1959 = vmatprep.subr.bf16.mxu0 0
      %1960 = vmatpush1.bf16.msra.mxu0 0
      %1961 = vmatprep.subr.bf16.mxu0 0
      %1962 = vmatpush1.bf16.msra.mxu0 0
      %1963 = vmatprep.subr.bf16.mxu0 0
      %1964 = vmatpush1.bf16.msra.mxu0 0
      %1965 = vmatprep.subr.bf16.mxu0 0
      %1966 = vmatpush1.bf16.msra.mxu0 0
      %1967 = vmatprep.subr.bf16.mxu0 0
      %1968 = vmatpush1.bf16.msra.mxu0 0
      %1969 = vmatprep.subr.bf16.mxu0 0
      %1970 = vmatpush1.bf16.msra.mxu0 0
      %1971 = vmatprep.mubr.bf16.mxu0 0
      %1972 = vmatmul.mubr.bf16.gmra.mrb[0].mxu0 %v1928
      %v1973 = vpop.f32.mrb[0].mxu0
      %v1974 = vadd.f32 0.0, %v1973
      %v1975 = vpop.f32.mrb[0].mxu0
      %v1976 = vadd.f32 0.0, %v1975
      %v1977 = vpop.f32.mrb[0].mxu0
      %v1978 = vpop.f32.mrb[0].mxu0
      %1979 = vdwg.mxu0
      %1980 = vmatprep.subr.bf16.mxu0 0
      %1981 = vmatpush1.bf16.msra.mxu0 %v1937
      %1982 = vmatprep.subr.bf16.mxu0 0
      %1983 = vmatpush1.bf16.msra.mxu0 0
      %1984 = vmatprep.subr.bf16.mxu0 0
      %1985 = vmatpush1.bf16.msra.mxu0 0
      %1986 = vmatprep.subr.bf16.mxu0 0
      %1987 = vmatpush1.bf16.msra.mxu0 0
      %1988 = vmatprep.subr.bf16.mxu0 0
      %1989 = vmatpush1.bf16.msra.mxu0 0
      %1990 = vmatprep.subr.bf16.mxu0 0
      %1991 = vmatpush1.bf16.msra.mxu0 0
      %1992 = vmatprep.subr.bf16.mxu0 0
      %1993 = vmatpush1.bf16.msra.mxu0 0
      %1994 = vmatprep.subr.bf16.mxu0 0
      %1995 = vmatpush1.bf16.msra.mxu0 0
      %1996 = vmatprep.subr.bf16.mxu0 0
      %1997 = vmatpush1.bf16.msra.mxu0 0
      %1998 = vmatprep.subr.bf16.mxu0 0
      %1999 = vmatpush1.bf16.msra.mxu0 0
      %2000 = vmatprep.subr.bf16.mxu0 0
      %2001 = vmatpush1.bf16.msra.mxu0 0
      %2002 = vmatprep.subr.bf16.mxu0 0
      %2003 = vmatpush1.bf16.msra.mxu0 0
      %2004 = vmatprep.subr.bf16.mxu0 0
      %2005 = vmatpush1.bf16.msra.mxu0 0
      %2006 = vmatprep.subr.bf16.mxu0 0
      %2007 = vmatpush1.bf16.msra.mxu0 0
      %2008 = vmatprep.subr.bf16.mxu0 0
      %2009 = vmatpush1.bf16.msra.mxu0 0
      %2010 = vmatprep.subr.bf16.mxu0 0
      %2011 = vmatpush1.bf16.msra.mxu0 0
      %2012 = vmatprep.mubr.bf16.mxu0 0
      %2013 = vmatmul.mubr.bf16.gmra.mrb[0].mxu0 %v1928
      %v2014 = vpop.f32.mrb[0].mxu0
      %v2015 = vadd.f32 0.0, %v2014
      %v2016 = vpop.f32.mrb[0].mxu0
      %v2017 = vpop.f32.mrb[0].mxu0
      %v2018 = vpop.f32.mrb[0].mxu0
      %2019 = vdwg.mxu0
      %v2020 = vadd.f32 %v1914, %v1974
      %v2021 = vadd.f32 %v1915, %v1976
      %v2022 = vadd.f32 %v1916, %v2015
      %s2023 = scalar_lea.vmem %s4, 12
      %v2024 = vld [vmem:[%s2023] sm:$0x3]
      %2025 = vrot.lane.b32.xlu0 %v1395, 92
      %v2026 = vpop.permute.xlu0 %2025
      %2027 = vrot.lane.b32.xlu0 %v1403, 92
      %v2028 = vpop.permute.xlu0 %2027
      %2029 = vrot.lane.b32.xlu0 %v1402, 92
      %v2030 = vpop.permute.xlu0 %2029
      %v2031 = vsel %vm954, %v2026, %v2028
      %v2032 = vsel %vm954, %v2028, %v2030
      %v2034 = vsel %vm1412, %v2024, 0
      %v2037 = vsel %vm1341, %v2031, 0
      %v2040 = vsel %vm1341, %v2032, 0
      %v2043 = vsel %vm1341, %v2030, 0
      %2045 = vmatprep.subr.bf16.mxu0 %v2040
      %2046 = vmatpush1.bf16.msra.mxu0 %v2037
      %2047 = vmatprep.subr.bf16.mxu0 0
      %2048 = vmatpush1.bf16.msra.mxu0 0
      %2049 = vmatprep.subr.bf16.mxu0 0
      %2050 = vmatpush1.bf16.msra.mxu0 0
      %2051 = vmatprep.subr.bf16.mxu0 0
      %2052 = vmatpush1.bf16.msra.mxu0 0
      %2053 = vmatprep.subr.bf16.mxu0 0
      %2054 = vmatpush1.bf16.msra.mxu0 0
      %2055 = vmatprep.subr.bf16.mxu0 0
      %2056 = vmatpush1.bf16.msra.mxu0 0
      %2057 = vmatprep.subr.bf16.mxu0 0
      %2058 = vmatpush1.bf16.msra.mxu0 0
      %2059 = vmatprep.subr.bf16.mxu0 0
      %2060 = vmatpush1.bf16.msra.mxu0 0
      %2061 = vmatprep.subr.bf16.mxu0 0
      %2062 = vmatpush1.bf16.msra.mxu0 0
      %2063 = vmatprep.subr.bf16.mxu0 0
      %2064 = vmatpush1.bf16.msra.mxu0 0
      %2065 = vmatprep.subr.bf16.mxu0 0
      %2066 = vmatpush1.bf16.msra.mxu0 0
      %2067 = vmatprep.subr.bf16.mxu0 0
      %2068 = vmatpush1.bf16.msra.mxu0 0
      %2069 = vmatprep.subr.bf16.mxu0 0
      %2070 = vmatpush1.bf16.msra.mxu0 0
      %2071 = vmatprep.subr.bf16.mxu0 0
      %2072 = vmatpush1.bf16.msra.mxu0 0
      %2073 = vmatprep.subr.bf16.mxu0 0
      %2074 = vmatpush1.bf16.msra.mxu0 0
      %2075 = vmatprep.subr.bf16.mxu0 0
      %2076 = vmatpush1.bf16.msra.mxu0 0
      %2077 = vmatprep.mubr.bf16.mxu0 0
      %2078 = vmatmul.mubr.bf16.gmra.mrb[0].mxu0 %v2034
      %v2079 = vpop.f32.mrb[0].mxu0
      %v2080 = vadd.f32 0.0, %v2079
      %v2081 = vpop.f32.mrb[0].mxu0
      %v2082 = vadd.f32 0.0, %v2081
      %v2083 = vpop.f32.mrb[0].mxu0
      %v2084 = vpop.f32.mrb[0].mxu0
      %2085 = vdwg.mxu0
      %2086 = vmatprep.subr.bf16.mxu0 0
      %2087 = vmatpush1.bf16.msra.mxu0 %v2043
      %2088 = vmatprep.subr.bf16.mxu0 0
      %2089 = vmatpush1.bf16.msra.mxu0 0
      %2090 = vmatprep.subr.bf16.mxu0 0
      %2091 = vmatpush1.bf16.msra.mxu0 0
      %2092 = vmatprep.subr.bf16.mxu0 0
      %2093 = vmatpush1.bf16.msra.mxu0 0
      %2094 = vmatprep.subr.bf16.mxu0 0
      %2095 = vmatpush1.bf16.msra.mxu0 0
      %2096 = vmatprep.subr.bf16.mxu0 0
      %2097 = vmatpush1.bf16.msra.mxu0 0
      %2098 = vmatprep.subr.bf16.mxu0 0
      %2099 = vmatpush1.bf16.msra.mxu0 0
      %2100 = vmatprep.subr.bf16.mxu0 0
      %2101 = vmatpush1.bf16.msra.mxu0 0
      %2102 = vmatprep.subr.bf16.mxu0 0
      %2103 = vmatpush1.bf16.msra.mxu0 0
      %2104 = vmatprep.subr.bf16.mxu0 0
      %2105 = vmatpush1.bf16.msra.mxu0 0
      %2106 = vmatprep.subr.bf16.mxu0 0
      %2107 = vmatpush1.bf16.msra.mxu0 0
      %2108 = vmatprep.subr.bf16.mxu0 0
      %2109 = vmatpush1.bf16.msra.mxu0 0
      %2110 = vmatprep.subr.bf16.mxu0 0
      %2111 = vmatpush1.bf16.msra.mxu0 0
      %2112 = vmatprep.subr.bf16.mxu0 0
      %2113 = vmatpush1.bf16.msra.mxu0 0
      %2114 = vmatprep.subr.bf16.mxu0 0
      %2115 = vmatpush1.bf16.msra.mxu0 0
      %2116 = vmatprep.subr.bf16.mxu0 0
      %2117 = vmatpush1.bf16.msra.mxu0 0
      %2118 = vmatprep.mubr.bf16.mxu0 0
      %2119 = vmatmul.mubr.bf16.gmra.mrb[0].mxu0 %v2034
      %v2120 = vpop.f32.mrb[0].mxu0
      %v2121 = vadd.f32 0.0, %v2120
      %v2122 = vpop.f32.mrb[0].mxu0
      %v2123 = vpop.f32.mrb[0].mxu0
      %v2124 = vpop.f32.mrb[0].mxu0
      %2125 = vdwg.mxu0
      %v2126 = vadd.f32 %v2020, %v2080
      %v2127 = vadd.f32 %v2021, %v2082
      %v2128 = vadd.f32 %v2022, %v2121
      %s2129 = scalar_lea.vmem %s4, 14
      %v2130 = vld [vmem:[%s2129] sm:$0x3]
      %2131 = vrot.lane.b32.xlu0 %v1395, 91
      %v2132 = vpop.permute.xlu0 %2131
      %2133 = vrot.lane.b32.xlu0 %v1403, 91
      %v2134 = vpop.permute.xlu0 %2133
      %2135 = vrot.lane.b32.xlu0 %v1402, 91
      %v2136 = vpop.permute.xlu0 %2135
      %v2137 = vsel %vm1061, %v2132, %v2134
      %v2138 = vsel %vm1061, %v2134, %v2136
      %v2140 = vsel %vm1412, %v2130, 0
      %v2143 = vsel %vm1341, %v2137, 0
      %v2146 = vsel %vm1341, %v2138, 0
      %v2149 = vsel %vm1341, %v2136, 0
      %2151 = vmatprep.subr.bf16.mxu0 %v2146
      %2152 = vmatpush1.bf16.msra.mxu0 %v2143
      %2153 = vmatprep.subr.bf16.mxu0 0
      %2154 = vmatpush1.bf16.msra.mxu0 0
      %2155 = vmatprep.subr.bf16.mxu0 0
      %2156 = vmatpush1.bf16.msra.mxu0 0
      %2157 = vmatprep.subr.bf16.mxu0 0
      %2158 = vmatpush1.bf16.msra.mxu0 0
      %2159 = vmatprep.subr.bf16.mxu0 0
      %2160 = vmatpush1.bf16.msra.mxu0 0
      %2161 = vmatprep.subr.bf16.mxu0 0
      %2162 = vmatpush1.bf16.msra.mxu0 0
      %2163 = vmatprep.subr.bf16.mxu0 0
      %2164 = vmatpush1.bf16.msra.mxu0 0
      %2165 = vmatprep.subr.bf16.mxu0 0
      %2166 = vmatpush1.bf16.msra.mxu0 0
      %2167 = vmatprep.subr.bf16.mxu0 0
      %2168 = vmatpush1.bf16.msra.mxu0 0
      %2169 = vmatprep.subr.bf16.mxu0 0
      %2170 = vmatpush1.bf16.msra.mxu0 0
      %2171 = vmatprep.subr.bf16.mxu0 0
      %2172 = vmatpush1.bf16.msra.mxu0 0
      %2173 = vmatprep.subr.bf16.mxu0 0
      %2174 = vmatpush1.bf16.msra.mxu0 0
      %2175 = vmatprep.subr.bf16.mxu0 0
      %2176 = vmatpush1.bf16.msra.mxu0 0
      %2177 = vmatprep.subr.bf16.mxu0 0
      %2178 = vmatpush1.bf16.msra.mxu0 0
      %2179 = vmatprep.subr.bf16.mxu0 0
      %2180 = vmatpush1.bf16.msra.mxu0 0
      %2181 = vmatprep.subr.bf16.mxu0 0
      %2182 = vmatpush1.bf16.msra.mxu0 0
      %2183 = vmatprep.mubr.bf16.mxu0 0
      %2184 = vmatmul.mubr.bf16.gmra.mrb[0].mxu0 %v2140
      %v2185 = vpop.f32.mrb[0].mxu0
      %v2186 = vadd.f32 0.0, %v2185
      %v2187 = vpop.f32.mrb[0].mxu0
      %v2188 = vadd.f32 0.0, %v2187
      %v2189 = vpop.f32.mrb[0].mxu0
      %v2190 = vpop.f32.mrb[0].mxu0
      %2191 = vdwg.mxu0
      %2192 = vmatprep.subr.bf16.mxu0 0
      %2193 = vmatpush1.bf16.msra.mxu0 %v2149
      %2194 = vmatprep.subr.bf16.mxu0 0
      %2195 = vmatpush1.bf16.msra.mxu0 0
      %2196 = vmatprep.subr.bf16.mxu0 0
      %2197 = vmatpush1.bf16.msra.mxu0 0
      %2198 = vmatprep.subr.bf16.mxu0 0
      %2199 = vmatpush1.bf16.msra.mxu0 0
      %2200 = vmatprep.subr.bf16.mxu0 0
      %2201 = vmatpush1.bf16.msra.mxu0 0
      %2202 = vmatprep.subr.bf16.mxu0 0
      %2203 = vmatpush1.bf16.msra.mxu0 0
      %2204 = vmatprep.subr.bf16.mxu0 0
      %2205 = vmatpush1.bf16.msra.mxu0 0
      %2206 = vmatprep.subr.bf16.mxu0 0
      %2207 = vmatpush1.bf16.msra.mxu0 0
      %2208 = vmatprep.subr.bf16.mxu0 0
      %2209 = vmatpush1.bf16.msra.mxu0 0
      %2210 = vmatprep.subr.bf16.mxu0 0
      %2211 = vmatpush1.bf16.msra.mxu0 0
      %2212 = vmatprep.subr.bf16.mxu0 0
      %2213 = vmatpush1.bf16.msra.mxu0 0
      %2214 = vmatprep.subr.bf16.mxu0 0
      %2215 = vmatpush1.bf16.msra.mxu0 0
      %2216 = vmatprep.subr.bf16.mxu0 0
      %2217 = vmatpush1.bf16.msra.mxu0 0
      %2218 = vmatprep.subr.bf16.mxu0 0
      %2219 = vmatpush1.bf16.msra.mxu0 0
      %2220 = vmatprep.subr.bf16.mxu0 0
      %2221 = vmatpush1.bf16.msra.mxu0 0
      %2222 = vmatprep.subr.bf16.mxu0 0
      %2223 = vmatpush1.bf16.msra.mxu0 0
      %2224 = vmatprep.mubr.bf16.mxu0 0
      %2225 = vmatmul.mubr.bf16.gmra.mrb[0].mxu0 %v2140
      %v2226 = vpop.f32.mrb[0].mxu0
      %v2227 = vadd.f32 0.0, %v2226
      %v2228 = vpop.f32.mrb[0].mxu0
      %v2229 = vpop.f32.mrb[0].mxu0
      %v2230 = vpop.f32.mrb[0].mxu0
      %2231 = vdwg.mxu0
      %v2232 = vadd.f32 %v2126, %v2186
      %v2233 = vadd.f32 %v2127, %v2188
      %v2234 = vadd.f32 %v2128, %v2227
      %s2235 = scalar_lea.vmem %s4, 16
      %v2236 = vld [vmem:[%s2235] sm:$0x3]
      %2237 = vrot.lane.b32.xlu0 %v1395, 90
      %v2238 = vpop.permute.xlu0 %2237
      %2239 = vrot.lane.b32.xlu0 %v1403, 90
      %v2240 = vpop.permute.xlu0 %2239
      %2241 = vrot.lane.b32.xlu0 %v1402, 90
      %v2242 = vpop.permute.xlu0 %2241
      %v2243 = vsel %vm1168, %v2238, %v2240
      %v2244 = vsel %vm1168, %v2240, %v2242
      %v2246 = vsel %vm1412, %v2236, 0
      %v2249 = vsel %vm1341, %v2243, 0
      %v2252 = vsel %vm1341, %v2244, 0
      %v2255 = vsel %vm1341, %v2242, 0
      %2257 = vmatprep.subr.bf16.mxu0 %v2252
      %2258 = vmatpush1.bf16.msra.mxu0 %v2249
      %2259 = vmatprep.subr.bf16.mxu0 0
      %2260 = vmatpush1.bf16.msra.mxu0 0
      %2261 = vmatprep.subr.bf16.mxu0 0
      %2262 = vmatpush1.bf16.msra.mxu0 0
      %2263 = vmatprep.subr.bf16.mxu0 0
      %2264 = vmatpush1.bf16.msra.mxu0 0
      %2265 = vmatprep.subr.bf16.mxu0 0
      %2266 = vmatpush1.bf16.msra.mxu0 0
      %2267 = vmatprep.subr.bf16.mxu0 0
      %2268 = vmatpush1.bf16.msra.mxu0 0
      %2269 = vmatprep.subr.bf16.mxu0 0
      %2270 = vmatpush1.bf16.msra.mxu0 0
      %2271 = vmatprep.subr.bf16.mxu0 0
      %2272 = vmatpush1.bf16.msra.mxu0 0
      %2273 = vmatprep.subr.bf16.mxu0 0
      %2274 = vmatpush1.bf16.msra.mxu0 0
      %2275 = vmatprep.subr.bf16.mxu0 0
      %2276 = vmatpush1.bf16.msra.mxu0 0
      %2277 = vmatprep.subr.bf16.mxu0 0
      %2278 = vmatpush1.bf16.msra.mxu0 0
      %2279 = vmatprep.subr.bf16.mxu0 0
      %2280 = vmatpush1.bf16.msra.mxu0 0
      %2281 = vmatprep.subr.bf16.mxu0 0
      %2282 = vmatpush1.bf16.msra.mxu0 0
      %2283 = vmatprep.subr.bf16.mxu0 0
      %2284 = vmatpush1.bf16.msra.mxu0 0
      %2285 = vmatprep.subr.bf16.mxu0 0
      %2286 = vmatpush1.bf16.msra.mxu0 0
      %2287 = vmatprep.subr.bf16.mxu0 0
      %2288 = vmatpush1.bf16.msra.mxu0 0
      %2289 = vmatprep.mubr.bf16.mxu0 0
      %2290 = vmatmul.mubr.bf16.gmra.mrb[0].mxu0 %v2246
      %v2291 = vpop.f32.mrb[0].mxu0
      %v2292 = vadd.f32 0.0, %v2291
      %v2293 = vpop.f32.mrb[0].mxu0
      %v2294 = vadd.f32 0.0, %v2293
      %v2295 = vpop.f32.mrb[0].mxu0
      %v2296 = vpop.f32.mrb[0].mxu0
      %2297 = vdwg.mxu0
      %2298 = vmatprep.subr.bf16.mxu0 0
      %2299 = vmatpush1.bf16.msra.mxu0 %v2255
      %2300 = vmatprep.subr.bf16.mxu0 0
      %2301 = vmatpush1.bf16.msra.mxu0 0
      %2302 = vmatprep.subr.bf16.mxu0 0
      %2303 = vmatpush1.bf16.msra.mxu0 0
      %2304 = vmatprep.subr.bf16.mxu0 0
      %2305 = vmatpush1.bf16.msra.mxu0 0
      %2306 = vmatprep.subr.bf16.mxu0 0
      %2307 = vmatpush1.bf16.msra.mxu0 0
      %2308 = vmatprep.subr.bf16.mxu0 0
      %2309 = vmatpush1.bf16.msra.mxu0 0
      %2310 = vmatprep.subr.bf16.mxu0 0
      %2311 = vmatpush1.bf16.msra.mxu0 0
      %2312 = vmatprep.subr.bf16.mxu0 0
      %2313 = vmatpush1.bf16.msra.mxu0 0
      %2314 = vmatprep.subr.bf16.mxu0 0
      %2315 = vmatpush1.bf16.msra.mxu0 0
      %2316 = vmatprep.subr.bf16.mxu0 0
      %2317 = vmatpush1.bf16.msra.mxu0 0
      %2318 = vmatprep.subr.bf16.mxu0 0
      %2319 = vmatpush1.bf16.msra.mxu0 0
      %2320 = vmatprep.subr.bf16.mxu0 0
      %2321 = vmatpush1.bf16.msra.mxu0 0
      %2322 = vmatprep.subr.bf16.mxu0 0
      %2323 = vmatpush1.bf16.msra.mxu0 0
      %2324 = vmatprep.subr.bf16.mxu0 0
      %2325 = vmatpush1.bf16.msra.mxu0 0
      %2326 = vmatprep.subr.bf16.mxu0 0
      %2327 = vmatpush1.bf16.msra.mxu0 0
      %2328 = vmatprep.subr.bf16.mxu0 0
      %2329 = vmatpush1.bf16.msra.mxu0 0
      %2330 = vmatprep.mubr.bf16.mxu0 0
      %2331 = vmatmul.mubr.bf16.gmra.mrb[0].mxu0 %v2246
      %v2332 = vpop.f32.mrb[0].mxu0
      %v2333 = vadd.f32 0.0, %v2332
      %v2334 = vpop.f32.mrb[0].mxu0
      %v2335 = vpop.f32.mrb[0].mxu0
      %v2336 = vpop.f32.mrb[0].mxu0
      %2337 = vdwg.mxu0
      %v2338 = vadd.f32 %v2232, %v2292
      %v2339 = vadd.f32 %v2233, %v2294
      %v2340 = vadd.f32 %v2234, %v2333
      %v2341 = vmul.f32 %v2338, %v1271
      %v2342 = vmul.f32 %v2339, %v1275
      %v2343 = vmul.f32 %v2340, %v1279
      %v2344 = vsel %vm334, %v2341, 0.0
      %v2345 = vsel %vm334, %v2342, 0.0
      %v2346 = vadd.f32 %v2344, %v2345
      %v2347 = vsel %vm1289, %v2343, 0.0
      %v2348 = vadd.f32 %v2346, %v2347
      %2349 = vadd.xlane.f32.xlu0 %v2348
      %v2350 = vpop.xlane.xlu0 %2349
      %v2351 = vmul.f32 %v2341, %v2338
      %v2352 = vmul.f32 %v2342, %v2339
      %v2353 = vmul.f32 %v2343, %v2340
      %v2354 = vsel %vm334, %v2351, 0.0
      %v2355 = vsel %vm334, %v2352, 0.0
      %v2356 = vadd.f32 %v2354, %v2355
      %v2357 = vsel %vm1289, %v2353, 0.0
      %v2358 = vadd.f32 %v2356, %v2357
      %2359 = vadd.xlane.f32.xlu0 %v2358
      %v2360 = vpop.xlane.xlu0 %2359
      %v2361 = vmul.f32 %v2350, 0.00390625
      %v2362 = vmul.f32 %v2360, 0.00390625
      %v2363 = vmul.f32 %v2361, %v2361
      %v2364 = vsub.f32 %v2362, %v2363
      %v2365 = vadd.f32 %v2364, 1e-05
      %v2366 = vrsqrt.pop %v2365
      %v2367 = vld [vmem:[%s5] sm:$0xf]
      %v2368 = vmul.f32 %v2366, %v2367
      %v2369 = vsub.f32 %v2338, %v2361
      %v2370 = vsub.f32 %v2339, %v2361
      %v2371 = vsub.f32 %v2340, %v2361
      %2373 = vset.pattern.permute.xlu0 0
      %2374 = vperm.xlu0 %2373, %v2368
      %v2375 = vpop.permute.xlu0 %2374
      %v2377 = vmul.f32 %v2369, %v2375
      %v2378 = vmul.f32 %v2370, %v2375
      %v2379 = vmul.f32 %v2371, %v2375
      %v2380 = vld [vmem:[%s6] sm:$0xf]
      %2382 = vset.pattern.permute.xlu0 0
      %2383 = vperm.xlu0 %2382, %v2380
      %v2384 = vpop.permute.xlu0 %2383
      %v2386 = vadd.f32 %v2377, %v2384
      %v2387 = vadd.f32 %v2378, %v2384
      %v2388 = vadd.f32 %v2379, %v2384
      %vm2389 = vcmp.ge.f32.partialorder %v2386, 0.0
      %vm2390 = vcmp.ge.f32.partialorder %v2387, 0.0
      %vm2391 = vcmp.ge.f32.partialorder %v2388, 0.0
      %v2392 = vmul.f32 %v2386, 0.01
      %v2393 = vmul.f32 %v2387, 0.01
      %v2394 = vmul.f32 %v2388, 0.01
      %v2395 = vsel %vm2389, %v2386, %v2392
      %v2396 = vsel %vm2390, %v2387, %v2393
      %v2397 = vsel %vm2391, %v2388, %v2394
      %v2400 = vcombine.low %v2395, %v2396
      %2402 = vst [vmem:[%s305] sm:$0xff] %v2400
      %2403 = vst.msk [vmem:[%s305 + $0x8] sm:$0xf] %vm1289, %v2397
      %p2404 = scmp.lt.s32.totalorder %s19, 1
      %s2405 = scalar_select %p2404, %s19, 1
      %s2406 = smul.addr %s2405, 3
      %s2407 = smul.addr %s2406, 4
      %s2408 = scalar_lea.vmem %s8, %s2407
      // Predicated region
      $region53: #{up_forward.1} parent=51 // pred_check
        %p2409 = pneg %p210
      $region54: #{up_forward.1} parent=51 // pred_check_branch
        %2411 = sbr.rel (%p2409) target = $region56
      $region55: #{up_forward.1} parent=51 // pred_region
        _
      $region56: #{up_forward.1} parent=51 // pred_fallthru
        _
    $region52: #{up_forward.1} parent=5 // pred_fallthru
      _
    %p2412 = scmp.le.s32.totalorder 2, %s14
    // Predicated region
    $region57: #{up_forward.1} parent=5 // pred_check
      %p2413 = pneg %p2412
    $region58: #{up_forward.1} parent=5 // pred_check_branch
      %2415 = sbr.rel (%p2413) target = $region60
    $region59: #{up_forward.1} parent=5 // pred_region
      %s2416 = ssub.s32 %s14, 2
      // Predicated region
      $region61: #{up_forward.1} parent=59 // pred_check
        %p2417 = pneg %p216
      $region62: #{up_forward.1} parent=59 // pred_check_branch
        %2419 = sbr.rel (%p2417) target = $region64
      $region63: #{up_forward.1} parent=59 // pred_region
        %p2420 = scmp.lt.s32.totalorder %s20, 1
        %s2421 = scalar_select %p2420, %s20, 1
        %s2422 = smul.addr %s2421, 3
        %s2423 = smul.addr %s2422, 4
        %s2424 = scalar_lea.vmem %s8, %s2423
      $region64: #{up_forward.1} parent=59 // pred_fallthru
        _
    $region60: #{up_forward.1} parent=5 // pred_fallthru
      _
  $region6: #{up_forward.1} parent=0 // loop_footer
    %s18 = sadd.s32 1, %s14
  $region7: #{up_forward.1} parent=0 // loop_footer_branch
    %13 = sbr.rel target = $region3
  $region8: #{up_forward.1} parent=0 // loop_exit
    _

</llo_original>
